<compile_context>
chip_gen: v5e
topology: v5e:2x2
jax: 0.10.0
libtpu: 0.0.40
codegen_flags: <defaults>
</compile_context>

<pallas_src>
import functools

import jax
import jax.numpy as jnp
from jax.experimental import pallas as pl
from jax.experimental.pallas import tpu as pltpu


# --------------------------------------------------------------------------- #
# kernels
# --------------------------------------------------------------------------- #
def layer1_kernel(a_ref, xw_ref, b1_ref, w2_ref, zw_ref, acc_ref):
    """ZW[i] = relu(sum_k A[i,k] @ XW[k] + b1) @ W2   (K-tiled accumulation)."""
    k = pl.program_id(1)

    @pl.when(k == 0)
    def _():
        acc_ref[...] = jnp.zeros_like(acc_ref)

    acc_ref[...] += jnp.dot(a_ref[...], xw_ref[...],
                            preferred_element_type=jnp.float32)

    @pl.when(k == pl.num_programs(1) - 1)
    def _():
        h = jnp.maximum(acc_ref[...] + b1_ref[...], 0.0)   # bias + ReLU in f32
        # F.dropout(x, training=self.training) is the identity in eval mode.
        # TODO(synk): training-mode dropout via pltpu.prng_seed/prng_random_bits.
        zw = jnp.dot(h.astype(jnp.bfloat16), w2_ref[...],
                     preferred_element_type=jnp.float32)
        zw_ref[...] = zw.astype(zw_ref.dtype)


def layer2_kernel(a_ref, zw_ref, b2_ref, out_ref, acc_ref, *, num_classes):
    """out[i] = log_softmax(sum_k A[i,k] @ ZW[k] + b2)   (K-tiled accumulation)."""
    k = pl.program_id(1)

    @pl.when(k == 0)
    def _():
        acc_ref[...] = jnp.zeros_like(acc_ref)

    acc_ref[...] += jnp.dot(a_ref[...], zw_ref[...],
                            preferred_element_type=jnp.float32)

    @pl.when(k == pl.num_programs(1) - 1)
    def _():
        z = acc_ref[...] + b2_ref[...]
        col = jax.lax.broadcasted_iota(jnp.int32, z.shape, 1)
        # Large finite negative (not -inf): keeps padded class columns out of
        # the LSE without risking NaN if the padded region is ever read.
        z = jnp.where(col < num_classes, z, jnp.float32(-1e30))
        m = jnp.max(z, axis=1, keepdims=True)
        lse = jnp.log(jnp.sum(jnp.exp(z - m), axis=1, keepdims=True)) + m
        out_ref[...] = z - lse


# --------------------------------------------------------------------------- #
# wrapper
# --------------------------------------------------------------------------- #
def _round_up(x, m):
    return ((x + m - 1) // m) * m


def _choose_tiles(n):
    """Row tile tm (>=2 grid steps, megacore-friendly) and K tile tk."""
    n128 = _round_up(n, 128)
    if n128 >= 2048:
        tm = 512
    elif n128 >= 1024:
        tm = 256
    else:
        tm = 128
    tk = min(512, n128)          # bounds VMEM to O(tm*tk) independent of N
    return tm, tk


def gcn_forward(a_hat, x, w1, b1, w2, b2):
    n, f = x.shape
    h = w1.shape[1]
    c = w2.shape[1]

    tm, tk = _choose_tiles(n)
    # tm, tk are both multiples of 128 with one dividing the other, so padding
    # to max(tm, tk) makes both tiles divide n_pad evenly.
    n_pad = _round_up(n, max(tm, tk))
    f_pad = _round_up(f, 128)
    h_pad = _round_up(h, 128)
    c_pad = _round_up(c, 128)

    # Pad + downcast MXU operands to bf16 (zero padding is benign: padded A
    # columns/rows are zero so they never contribute to real outputs).
    a_p = jnp.zeros((n_pad, n_pad), jnp.bfloat16).at[:n, :n].set(
        a_hat.astype(jnp.bfloat16))
    x_p = jnp.zeros((n_pad, f_pad), jnp.bfloat16).at[:n, :f].set(
        x.astype(jnp.bfloat16))
    w1_p = jnp.zeros((f_pad, h_pad), jnp.bfloat16).at[:f, :h].set(
        w1.astype(jnp.bfloat16))
    w2_p = jnp.zeros((h_pad, c_pad), jnp.bfloat16).at[:h, :c].set(
        w2.astype(jnp.bfloat16))
    b1_p = jnp.zeros((1, h_pad), jnp.float32).at[:, :h].set(
        b1.astype(jnp.float32).reshape(1, h))
    b2_p = jnp.zeros((1, c_pad), jnp.float32).at[:, :c].set(
        b2.astype(jnp.float32).reshape(1, c))

    # Tiny one-shot matmul: let XLA fuse it with the pad/cast above.
    xw = jnp.dot(x_p, w1_p,
                 preferred_element_type=jnp.float32).astype(jnp.bfloat16)

    grid = (n_pad // tm, n_pad // tk)
    num_steps = grid[0] * grid[1]
    # 3-deep buffering on the one stream that matters (A strips); default
    # double-buffering if the grid is too short for it to help.
    a_mode = pl.Buffered(3) if num_steps >= 4 else None
    single = pl.Buffered(1)   # grid-invariant operands: no double-buffering

    params = pltpu.CompilerParams(
        dimension_semantics=("parallel", "arbitrary"),  # megacore on row axis
    )

    # ---- layer 1: ZW = relu(A @ XW + b1) @ W2 (row-tiled, K-tiled) ----------
    zw = pl.pallas_call(
        layer1_kernel,
        out_shape=jax.ShapeDtypeStruct((n_pad, c_pad), jnp.bfloat16),
        grid_spec=pltpu.PrefetchScalarGridSpec(
            num_scalar_prefetch=0,
            grid=grid,
            in_specs=[
                pl.BlockSpec((tm, tk), lambda i, k: (i, k),
                             pipeline_mode=a_mode),
                pl.BlockSpec((tk, h_pad), lambda i, k: (k, 0)),
                pl.BlockSpec((1, h_pad), lambda i, k: (0, 0),
                             pipeline_mode=single),
                pl.BlockSpec((h_pad, c_pad), lambda i, k: (0, 0),
                             pipeline_mode=single),
            ],
            out_specs=pl.BlockSpec((tm, c_pad), lambda i, k: (i, 0)),
            scratch_shapes=[pltpu.VMEM((tm, h_pad), jnp.float32)],
        ),
        compiler_params=params,
    )(a_p, xw, b1_p, w2_p)

    # ---- layer 2: out = log_softmax(A @ ZW + b2) (row-tiled, K-tiled) -------
    out = pl.pallas_call(
        functools.partial(layer2_kernel, num_classes=c),
        out_shape=jax.ShapeDtypeStruct((n_pad, c_pad), jnp.float32),
        grid_spec=pltpu.PrefetchScalarGridSpec(
            num_scalar_prefetch=0,
            grid=grid,
            in_specs=[
                pl.BlockSpec((tm, tk), lambda i, k: (i, k),
                             pipeline_mode=a_mode),
                pl.BlockSpec((tk, c_pad), lambda i, k: (k, 0)),
                pl.BlockSpec((1, c_pad), lambda i, k: (0, 0),
                             pipeline_mode=single),
            ],
            out_specs=pl.BlockSpec((tm, c_pad), lambda i, k: (i, 0)),
            scratch_shapes=[pltpu.VMEM((tm, c_pad), jnp.float32)],
        ),
        compiler_params=params,
    )(a_p, zw, b2_p)

    return out[:n, :c]


# --------------------------------------------------------------------------- #
# graph preprocessing (plain JAX; matches pyg GCNConv gcn_norm w/ self-loops)
# --------------------------------------------------------------------------- #
def build_normalized_adjacency(edge_index, num_nodes):
    """Dense D^{-1/2} (A + I) D^{-1/2}, A[dst, src] = 1."""
    src, dst = edge_index[0], edge_index[1]
    a = jnp.zeros((num_nodes, num_nodes), jnp.float32)
    a = a.at[dst, src].set(1.0)                             # dedup duplicate edges
    a = a + jnp.eye(num_nodes, dtype=jnp.float32)           # add self-loops
    deg = jnp.sum(a, axis=1)
    dinv = jnp.where(deg > 0, 1.0 / jnp.sqrt(deg), 0.0)
    return dinv[:, None] * a * dinv[None, :]


if __name__ == "__main__":
    key = jax.random.PRNGKey(0)
    k_feat, k_es, k_ed, k_w1, k_w2 = jax.random.split(key, 5)

    num_nodes = 250      # exercises N padding (250 -> 256) and a 2-step row grid
    num_feat = 96        # exercises feature padding (96 -> 128)
    hidden = 16          # GCNConv(num_node_features, 16)
    num_classes = 7      # Cora has 7 classes

    x = jax.random.normal(k_feat, (num_nodes, num_feat), jnp.float32)
    num_edges = 1024
    src = jax.random.randint(k_es, (num_edges,), 0, num_nodes)
    dst = jax.random.randint(k_ed, (num_edges,), 0, num_nodes)
    edge_index = jnp.stack([src, dst], axis=0)

    a_hat = build_normalized_adjacency(edge_index, num_nodes)

    # deterministic glorot-style weight init, zero bias (GCNConv default)
    lim1 = (6.0 / (num_feat + hidden)) ** 0.5
    w1 = jax.random.uniform(k_w1, (num_feat, hidden), jnp.float32, -lim1, lim1)
    b1 = jnp.zeros((1, hidden), jnp.float32)
    lim2 = (6.0 / (hidden + num_classes)) ** 0.5
    w2 = jax.random.uniform(k_w2, (hidden, num_classes), jnp.float32, -lim2, lim2)
    b2 = jnp.zeros((1, num_classes), jnp.float32)

    fwd = jax.jit(gcn_forward)
    out = fwd(a_hat, x, w1, b1, w2, b2)
    out = jax.block_until_ready(out)

    # pure-JAX reference mirroring the kernel's bf16 operand / f32-accum scheme
    bf = lambda v: v.astype(jnp.bfloat16).astype(jnp.float32)
    a_b, x_b, w1_b, w2_b = bf(a_hat), bf(x), bf(w1), bf(w2)
    xw_r = bf(x_b @ w1_b)
    h_r = jnp.maximum(a_b @ xw_r + b1, 0.0)
    zw_r = bf(bf(h_r) @ w2_b)
    z_r = a_b @ zw_r + b2
    ref = jax.nn.log_softmax(z_r, axis=1)

    assert out.shape == (num_nodes, num_classes)
    row_prob = jnp.sum(jnp.exp(out), axis=1)
    assert bool(jnp.all(jnp.abs(row_prob - 1.0) < 1e-3))
    assert bool(jnp.max(jnp.abs(out - ref)) < 5e-2)
    print("KERNEL_OK")
</pallas_src>

<mosaic_0001>
module attributes {stable_mosaic.version = 11 : i64} {
  func.func @layer1_kernel(%arg0: i32, %arg1: i32, %arg2: memref<128x256xbf16, #tpu.memory_space<vmem>>, %arg3: memref<256x128xbf16, #tpu.memory_space<vmem>>, %arg4: memref<1x128xf32, #tpu.memory_space<vmem>>, %arg5: memref<128x128xbf16, #tpu.memory_space<vmem>>, %arg6: memref<128x128xbf16, #tpu.memory_space<vmem>>, %arg7: memref<128x128xf32, #tpu.memory_space<vmem>>) attributes {dimension_semantics = [#tpu.dimension_semantics<parallel>, #tpu.dimension_semantics<arbitrary>], iteration_bounds = array<i64: 2, 1>, scalar_prefetch = 0 : i64, scratch_operands = 1 : i64, tpu.core_type = #tpu.core_type<tc>, window_params = [{transform_indices = @transform_0, window_bounds = array<i64: 128, 256>}, {transform_indices = @transform_1, window_bounds = array<i64: 256, 128>}, {pipeline_mode = #tpu.pipeline_mode<synchronous>, transform_indices = @transform_2, window_bounds = array<i64: 1, 128>}, {pipeline_mode = #tpu.pipeline_mode<synchronous>, transform_indices = @transform_3, window_bounds = array<i64: 128, 128>}, {transform_indices = @transform_4, window_bounds = array<i64: 128, 128>}]} {
    %c0_i32 = arith.constant 0 : i32
    %0 = arith.cmpi eq, %arg1, %c0_i32 : i32
    %1 = arith.extui %0 : i1 to i32
    %c0_i32_0 = arith.constant 0 : i32
    %2 = arith.cmpi ne, %1, %c0_i32_0 : i32
    scf.if %2 {
      %cst_10 = arith.constant 0.000000e+00 : f32
      %12 = vector.broadcast %cst_10 : f32 to vector<128x128xf32>
      %c0_11 = arith.constant 0 : index
      %c0_12 = arith.constant 0 : index
      %13 = vector.load %arg7[%c0_11, %c0_12] : memref<128x128xf32, #tpu.memory_space<vmem>>, vector<128x128xf32>
      tpu.vector_store %arg7[%c0_11, %c0_12], %12 {strides = array<i32>} : memref<128x128xf32, #tpu.memory_space<vmem>>, vector<128x128xf32>,
    } else {
    }
    %c0 = arith.constant 0 : index
    %c0_1 = arith.constant 0 : index
    %3 = vector.load %arg7[%c0, %c0_1] : memref<128x128xf32, #tpu.memory_space<vmem>>, vector<128x128xf32>
    %c0_2 = arith.constant 0 : index
    %c0_3 = arith.constant 0 : index
    %4 = vector.load %arg2[%c0_2, %c0_3] : memref<128x256xbf16, #tpu.memory_space<vmem>>, vector<128x256xbf16>
    %c0_4 = arith.constant 0 : index
    %c0_5 = arith.constant 0 : index
    %5 = vector.load %arg3[%c0_4, %c0_5] : memref<256x128xbf16, #tpu.memory_space<vmem>>, vector<256x128xbf16>
    %cst = arith.constant dense<0.000000e+00> : vector<128x128xf32>
    %6 = tpu.matmul %4, %5, %cst {dimension_numbers = #tpu.dot_dimension_numbers<[1], [0], [0], [1], [0, 0, 1, 1], [], []>} : vector<128x256xbf16>, vector<256x128xbf16>, vector<128x128xf32> -> vector<128x128xf32>
    %7 = arith.addf %3, %6 : vector<128x128xf32>
    %c0_6 = arith.constant 0 : index
    %c0_7 = arith.constant 0 : index
    %8 = vector.load %arg7[%c0_6, %c0_7] : memref<128x128xf32, #tpu.memory_space<vmem>>, vector<128x128xf32>
    tpu.vector_store %arg7[%c0_6, %c0_7], %7 {strides = array<i32>} : memref<128x128xf32, #tpu.memory_space<vmem>>, vector<128x128xf32>,
    %c0_i32_8 = arith.constant 0 : i32
    %9 = arith.cmpi eq, %arg1, %c0_i32_8 : i32
    %10 = arith.extui %9 : i1 to i32
    %c0_i32_9 = arith.constant 0 : i32
    %11 = arith.cmpi ne, %10, %c0_i32_9 : i32
    scf.if %11 {
      %c0_10 = arith.constant 0 : index
      %c0_11 = arith.constant 0 : index
      %12 = vector.load %arg7[%c0_10, %c0_11] : memref<128x128xf32, #tpu.memory_space<vmem>>, vector<128x128xf32>
      %c0_12 = arith.constant 0 : index
      %c0_13 = arith.constant 0 : index
      %13 = vector.load %arg4[%c0_12, %c0_13] : memref<1x128xf32, #tpu.memory_space<vmem>>, vector<1x128xf32>
      %14 = vector.broadcast %13 : vector<1x128xf32> to vector<128x128xf32>
      %15 = arith.addf %12, %14 : vector<128x128xf32>
      %cst_14 = arith.constant 0.000000e+00 : f32
      %16 = vector.broadcast %cst_14 : f32 to vector<128x128xf32>
      %17 = arith.maximumf %15, %16 : vector<128x128xf32>
      %18 = arith.truncf %17 : vector<128x128xf32> to vector<128x128xbf16>
      %c0_15 = arith.constant 0 : index
      %c0_16 = arith.constant 0 : index
      %19 = vector.load %arg5[%c0_15, %c0_16] : memref<128x128xbf16, #tpu.memory_space<vmem>>, vector<128x128xbf16>
      %cst_17 = arith.constant dense<0.000000e+00> : vector<128x128xf32>
      %20 = tpu.matmul %18, %19, %cst_17 {dimension_numbers = #tpu.dot_dimension_numbers<[1], [0], [0], [1], [0, 0, 1, 1], [], []>} : vector<128x128xbf16>, vector<128x128xbf16>, vector<128x128xf32> -> vector<128x128xf32>
      %21 = arith.truncf %20 : vector<128x128xf32> to vector<128x128xbf16>
      %c0_18 = arith.constant 0 : index
      %c0_19 = arith.constant 0 : index
      %22 = vector.load %arg6[%c0_18, %c0_19] : memref<128x128xbf16, #tpu.memory_space<vmem>>, vector<128x128xbf16>
      tpu.vector_store %arg6[%c0_18, %c0_19], %21 {strides = array<i32>} : memref<128x128xbf16, #tpu.memory_space<vmem>>, vector<128x128xbf16>,
    } else {
    }
    return
  }
  func.func @transform_0(%arg0: i32, %arg1: i32) -> (i32, i32) {
    %c0_i32 = arith.constant 0 : i32
    return %arg0, %arg1 : i32, i32
  }
  func.func @transform_1(%arg0: i32, %arg1: i32) -> (i32, i32) {
    %c0_i32 = arith.constant 0 : i32
    %c0_i32_0 = arith.constant 0 : i32
    return %arg1, %c0_i32 : i32, i32
  }
  func.func @transform_2(%arg0: i32, %arg1: i32) -> (i32, i32) {
    %c0_i32 = arith.constant 0 : i32
    %c0_i32_0 = arith.constant 0 : i32
    %c0_i32_1 = arith.constant 0 : i32
    return %c0_i32, %c0_i32_0 : i32, i32
  }
  func.func @transform_3(%arg0: i32, %arg1: i32) -> (i32, i32) {
    %c0_i32 = arith.constant 0 : i32
    %c0_i32_0 = arith.constant 0 : i32
    %c0_i32_1 = arith.constant 0 : i32
    return %c0_i32, %c0_i32_0 : i32, i32
  }
  func.func @transform_4(%arg0: i32, %arg1: i32) -> (i32, i32) {
    %c0_i32 = arith.constant 0 : i32
    %c0_i32_0 = arith.constant 0 : i32
    return %arg0, %c0_i32 : i32, i32
  }
}

module attributes {stable_mosaic.version = 11 : i64} {
  func.func @layer2_kernel(%arg0: i32, %arg1: i32, %arg2: memref<128x256xbf16, #tpu.memory_space<vmem>>, %arg3: memref<256x128xbf16, #tpu.memory_space<vmem>>, %arg4: memref<1x128xf32, #tpu.memory_space<vmem>>, %arg5: memref<128x128xf32, #tpu.memory_space<vmem>>, %arg6: memref<128x128xf32, #tpu.memory_space<vmem>>) attributes {dimension_semantics = [#tpu.dimension_semantics<parallel>, #tpu.dimension_semantics<arbitrary>], iteration_bounds = array<i64: 2, 1>, scalar_prefetch = 0 : i64, scratch_operands = 1 : i64, tpu.core_type = #tpu.core_type<tc>, window_params = [{transform_indices = @transform_0, window_bounds = array<i64: 128, 256>}, {transform_indices = @transform_1, window_bounds = array<i64: 256, 128>}, {pipeline_mode = #tpu.pipeline_mode<synchronous>, transform_indices = @transform_2, window_bounds = array<i64: 1, 128>}, {transform_indices = @transform_3, window_bounds = array<i64: 128, 128>}]} {
    %c0_i32 = arith.constant 0 : i32
    %0 = arith.cmpi eq, %arg1, %c0_i32 : i32
    %1 = arith.extui %0 : i1 to i32
    %c0_i32_0 = arith.constant 0 : i32
    %2 = arith.cmpi ne, %1, %c0_i32_0 : i32
    scf.if %2 {
      %cst_10 = arith.constant 0.000000e+00 : f32
      %12 = vector.broadcast %cst_10 : f32 to vector<128x128xf32>
      %c0_11 = arith.constant 0 : index
      %c0_12 = arith.constant 0 : index
      %13 = vector.load %arg6[%c0_11, %c0_12] : memref<128x128xf32, #tpu.memory_space<vmem>>, vector<128x128xf32>
      tpu.vector_store %arg6[%c0_11, %c0_12], %12 {strides = array<i32>} : memref<128x128xf32, #tpu.memory_space<vmem>>, vector<128x128xf32>,
    } else {
    }
    %c0 = arith.constant 0 : index
    %c0_1 = arith.constant 0 : index
    %3 = vector.load %arg6[%c0, %c0_1] : memref<128x128xf32, #tpu.memory_space<vmem>>, vector<128x128xf32>
    %c0_2 = arith.constant 0 : index
    %c0_3 = arith.constant 0 : index
    %4 = vector.load %arg2[%c0_2, %c0_3] : memref<128x256xbf16, #tpu.memory_space<vmem>>, vector<128x256xbf16>
    %c0_4 = arith.constant 0 : index
    %c0_5 = arith.constant 0 : index
    %5 = vector.load %arg3[%c0_4, %c0_5] : memref<256x128xbf16, #tpu.memory_space<vmem>>, vector<256x128xbf16>
    %cst = arith.constant dense<0.000000e+00> : vector<128x128xf32>
    %6 = tpu.matmul %4, %5, %cst {dimension_numbers = #tpu.dot_dimension_numbers<[1], [0], [0], [1], [0, 0, 1, 1], [], []>} : vector<128x256xbf16>, vector<256x128xbf16>, vector<128x128xf32> -> vector<128x128xf32>
    %7 = arith.addf %3, %6 : vector<128x128xf32>
    %c0_6 = arith.constant 0 : index
    %c0_7 = arith.constant 0 : index
    %8 = vector.load %arg6[%c0_6, %c0_7] : memref<128x128xf32, #tpu.memory_space<vmem>>, vector<128x128xf32>
    tpu.vector_store %arg6[%c0_6, %c0_7], %7 {strides = array<i32>} : memref<128x128xf32, #tpu.memory_space<vmem>>, vector<128x128xf32>,
    %c0_i32_8 = arith.constant 0 : i32
    %9 = arith.cmpi eq, %arg1, %c0_i32_8 : i32
    %10 = arith.extui %9 : i1 to i32
    %c0_i32_9 = arith.constant 0 : i32
    %11 = arith.cmpi ne, %10, %c0_i32_9 : i32
    scf.if %11 {
      %c0_10 = arith.constant 0 : index
      %c0_11 = arith.constant 0 : index
      %12 = vector.load %arg6[%c0_10, %c0_11] : memref<128x128xf32, #tpu.memory_space<vmem>>, vector<128x128xf32>
      %c0_12 = arith.constant 0 : index
      %c0_13 = arith.constant 0 : index
      %13 = vector.load %arg4[%c0_12, %c0_13] : memref<1x128xf32, #tpu.memory_space<vmem>>, vector<1x128xf32>
      %14 = vector.broadcast %13 : vector<1x128xf32> to vector<128x128xf32>
      %15 = arith.addf %12, %14 : vector<128x128xf32>
      %16 = tpu.iota {dimensions = array<i32: 1>} : vector<128x128xi32>
      %c7_i32 = arith.constant 7 : i32
      %17 = vector.broadcast %c7_i32 : i32 to vector<128x128xi32>
      %18 = arith.cmpi slt, %16, %17 : vector<128x128xi32>
      %cst_14 = arith.constant -1.000000e+30 : f32
      %19 = vector.broadcast %cst_14 : f32 to vector<128x128xf32>
      %20 = arith.select %18, %15, %19 : vector<128x128xi1>, vector<128x128xf32>
      %cst_15 = arith.constant dense<0xFF800000> : vector<128xf32>
      %21 = vector.multi_reduction <maximumf>, %20, %cst_15 [1] : vector<128x128xf32> to vector<128xf32>
      %22 = vector.shape_cast %21 : vector<128xf32> to vector<128x1xf32>
      %23 = vector.broadcast %22 : vector<128x1xf32> to vector<128x128xf32>
      %24 = arith.subf %20, %23 : vector<128x128xf32>
      %25 = math.exp %24 : vector<128x128xf32>
      %cst_16 = arith.constant dense<0.000000e+00> : vector<128xf32>
      %26 = vector.multi_reduction <add>, %25, %cst_16 [1] : vector<128x128xf32> to vector<128xf32>
      %27 = vector.shape_cast %26 : vector<128xf32> to vector<128x1xf32>
      %28 = math.log %27 : vector<128x1xf32>
      %29 = arith.addf %28, %22 : vector<128x1xf32>
      %30 = vector.broadcast %29 : vector<128x1xf32> to vector<128x128xf32>
      %31 = arith.subf %20, %30 : vector<128x128xf32>
      %c0_17 = arith.constant 0 : index
      %c0_18 = arith.constant 0 : index
      %32 = vector.load %arg5[%c0_17, %c0_18] : memref<128x128xf32, #tpu.memory_space<vmem>>, vector<128x128xf32>
      tpu.vector_store %arg5[%c0_17, %c0_18], %31 {strides = array<i32>} : memref<128x128xf32, #tpu.memory_space<vmem>>, vector<128x128xf32>,
    } else {
    }
    return
  }
  func.func @transform_0(%arg0: i32, %arg1: i32) -> (i32, i32) {
    %c0_i32 = arith.constant 0 : i32
    return %arg0, %arg1 : i32, i32
  }
  func.func @transform_1(%arg0: i32, %arg1: i32) -> (i32, i32) {
    %c0_i32 = arith.constant 0 : i32
    %c0_i32_0 = arith.constant 0 : i32
    return %arg1, %c0_i32 : i32, i32
  }
  func.func @transform_2(%arg0: i32, %arg1: i32) -> (i32, i32) {
    %c0_i32 = arith.constant 0 : i32
    %c0_i32_0 = arith.constant 0 : i32
    %c0_i32_1 = arith.constant 0 : i32
    return %c0_i32, %c0_i32_0 : i32, i32
  }
  func.func @transform_3(%arg0: i32, %arg1: i32) -> (i32, i32) {
    %c0_i32 = arith.constant 0 : i32
    %c0_i32_0 = arith.constant 0 : i32
    return %arg0, %c0_i32 : i32, i32
  }
}

</mosaic_0001>

<llo_original>
// kernel: gcn_forward.2
$region0: #{gcn_forward.2}
  #allocation0 [shape = 'u32[]', space=smem, size = 0x4, offset = 0x4, fixed_abs, tag = 'smem constant byte address 0x4 - core index']
  #allocation1 [shape = 'u32[72,128]{1,0:T(1,128)}', space=vmem, size = 0x9000, scoped, tag = 'internal scratch']
  #allocation2 [shape = 'f32[128,128]{1,0:T(8,128)}', space=vmem, size = 0x10000, scoped, tag = 'scratch operand']
  %s0 = inlined_call_operand.vmem [shape: bf16[256,256], index: 0, kind: input, shape index: {}]
  %s1 = inlined_call_operand.vmem [shape: bf16[256,128], index: 1, kind: input, shape index: {}]
  %s2 = inlined_call_operand.vmem [shape: f32[1,128], index: 2, kind: input, shape index: {}]
  %s3 = inlined_call_operand.vmem [shape: bf16[128,128], index: 3, kind: input, shape index: {}]
  %s4 = inlined_call_operand.vmem [shape: bf16[256,128], index: 4, kind: output, shape index: {}]
  %s5 = sld [smem:[#allocation0]]
  $region57: #{gcn_forward.2} parent=0
    _
  %s7 = ssub.s32 1, %s5
  %s8 = scalar_select 0, %s7, %s5
  loop: start=0, step=1, limit=4
  $region2: #{gcn_forward.2} parent=0 // loop_pre_header
    _
  $region3: #{gcn_forward.2} parent=0 // loop_header
    %s10 = sphi 0, %s14
    %p11 = scmp.ge.s32.totalorder %s10, 4
    %s17 = sphi 0, %s29
    %s18 = sphi 0, %s25
    %s19 = sphi 0, %s17
    %s20 = sphi 0, %s18
    %s21 = sphi 0, %s19
    %s22 = sphi 0, %s20
    %s34 = sphi 0, %s36
    %s37 = sphi 0, %s34
    %s38 = sphi 0, %s37
    %s54 = sphi 0, %s38
    %s60 = sphi 0, %s62
    %s63 = sphi 0, %s60
    %s64 = sphi 0, %s63
    %s80 = sphi 0, %s64
    %s84 = sphi 0, %s84
    %s86 = sphi 0, %s84
    %s87 = sphi 0, %s86
    %s101 = sphi 0, %s87
    %s105 = sphi 0, %s105
    %s107 = sphi 0, %s105
    %s108 = sphi 0, %s107
    %s122 = sphi 0, %s108
    %s128 = sphi 0, %s130
    %s131 = sphi 0, %s128
    %s132 = sphi 0, %s131
    %s148 = sphi 0, %s132
  $region4: #{gcn_forward.2} parent=0 // loop_header_branch
    %13 = sbr.rel (%p11) target = $region8
  $region5: #{gcn_forward.2} parent=0 // loop_body
    %s15 = ssub.s32 %s10, 1
    %s16 = ssub.s32 %s10, 2
    %s23 = sadd.s32 1, %s18
    %p24 = scmp.ge.s32.totalorder %s23, 1
    %s25 = scalar_select %p24, 0, %s23
    %s26 = sadd.s32 1, %s17
    %s27 = scalar_select %p24, %s26, %s17
    %p28 = scmp.ge.s32.totalorder %s27, 2
    %s29 = scalar_select %p28, 0, %s27
    %s30 = ssub.s32 %s17, %s29
    %s31 = ssub.s32 %s18, %s25
    %s32 = sor.u32 %s30, %s31
    %p33 = scmp.eq.s32.totalorder %s32, 0
    %s35 = sadd.s32 %s34, 1
    %s36 = scalar_select %p33, %s34, %s35
    %p39 = pneg %p33
    %p40 = scmp.eq.s32.totalorder %s10, 1
    %p41 = por %p39, %p40
    %p42 = scmp.ne.s32.totalorder %s34, %s37
    %p43 = scmp.eq.s32.totalorder %s10, 0
    %p44 = por %p42, %p43
    %p45 = scmp.ne.s32.totalorder %s34, %s37
    %p46 = scmp.eq.s32.totalorder %s15, 1
    %p47 = por %p45, %p46
    %p48 = scmp.ne.s32.totalorder %s37, %s38
    %p49 = scmp.eq.s32.totalorder %s15, 0
    %p50 = por %p48, %p49
    %p51 = scmp.ne.s32.totalorder %s37, %s38
    %p52 = scmp.eq.s32.totalorder %s16, 1
    %p53 = por %p51, %p52
    %p55 = scmp.ne.s32.totalorder %s38, %s54
    %p56 = scmp.eq.s32.totalorder %s16, 0
    %p57 = por %p55, %p56
    %s58 = ssub.s32 %s18, %s25
    %p59 = scmp.eq.s32.totalorder %s58, 0
    %s61 = sadd.s32 %s60, 1
    %s62 = scalar_select %p59, %s60, %s61
    %p65 = pneg %p59
    %p66 = scmp.eq.s32.totalorder %s10, 1
    %p67 = por %p65, %p66
    %p68 = scmp.ne.s32.totalorder %s60, %s63
    %p69 = scmp.eq.s32.totalorder %s10, 0
    %p70 = por %p68, %p69
    %p71 = scmp.ne.s32.totalorder %s60, %s63
    %p72 = scmp.eq.s32.totalorder %s15, 1
    %p73 = por %p71, %p72
    %p74 = scmp.ne.s32.totalorder %s63, %s64
    %p75 = scmp.eq.s32.totalorder %s15, 0
    %p76 = por %p74, %p75
    %p77 = scmp.ne.s32.totalorder %s63, %s64
    %p78 = scmp.eq.s32.totalorder %s16, 1
    %p79 = por %p77, %p78
    %p81 = scmp.ne.s32.totalorder %s64, %s80
    %p82 = scmp.eq.s32.totalorder %s16, 0
    %p83 = por %p81, %p82
    %s85 = sadd.s32 %s84, 1
    %p88 = scmp.eq.s32.totalorder %s10, 1
    %p89 = scmp.ne.s32.totalorder %s84, %s86
    %p90 = scmp.eq.s32.totalorder %s10, 0
    %p91 = por %p89, %p90
    %p92 = scmp.ne.s32.totalorder %s84, %s86
    %p93 = scmp.eq.s32.totalorder %s15, 1
    %p94 = por %p92, %p93
    %p95 = scmp.ne.s32.totalorder %s86, %s87
    %p96 = scmp.eq.s32.totalorder %s15, 0
    %p97 = por %p95, %p96
    %p98 = scmp.ne.s32.totalorder %s86, %s87
    %p99 = scmp.eq.s32.totalorder %s16, 1
    %p100 = por %p98, %p99
    %p102 = scmp.ne.s32.totalorder %s87, %s101
    %p103 = scmp.eq.s32.totalorder %s16, 0
    %p104 = por %p102, %p103
    %s106 = sadd.s32 %s105, 1
    %p109 = scmp.eq.s32.totalorder %s10, 1
    %p110 = scmp.ne.s32.totalorder %s105, %s107
    %p111 = scmp.eq.s32.totalorder %s10, 0
    %p112 = por %p110, %p111
    %p113 = scmp.ne.s32.totalorder %s105, %s107
    %p114 = scmp.eq.s32.totalorder %s15, 1
    %p115 = por %p113, %p114
    %p116 = scmp.ne.s32.totalorder %s107, %s108
    %p117 = scmp.eq.s32.totalorder %s15, 0
    %p118 = por %p116, %p117
    %p119 = scmp.ne.s32.totalorder %s107, %s108
    %p120 = scmp.eq.s32.totalorder %s16, 1
    %p121 = por %p119, %p120
    %p123 = scmp.ne.s32.totalorder %s108, %s122
    %p124 = scmp.eq.s32.totalorder %s16, 0
    %p125 = por %p123, %p124
    %s126 = ssub.s32 %s17, %s29
    %p127 = scmp.eq.s32.totalorder %s126, 0
    %s129 = sadd.s32 %s128, 1
    %s130 = scalar_select %p127, %s128, %s129
    %p133 = pneg %p127
    %p134 = scmp.eq.s32.totalorder %s10, 1
    %p135 = por %p133, %p134
    %p136 = scmp.ne.s32.totalorder %s128, %s131
    %p137 = scmp.eq.s32.totalorder %s10, 0
    %p138 = por %p136, %p137
    %p139 = scmp.ne.s32.totalorder %s128, %s131
    %p140 = scmp.eq.s32.totalorder %s15, 1
    %p141 = por %p139, %p140
    %p142 = scmp.ne.s32.totalorder %s131, %s132
    %p143 = scmp.eq.s32.totalorder %s15, 0
    %p144 = por %p142, %p143
    %p145 = scmp.ne.s32.totalorder %s131, %s132
    %p146 = scmp.eq.s32.totalorder %s16, 1
    %p147 = por %p145, %p146
    %p149 = scmp.ne.s32.totalorder %s132, %s148
    %p150 = scmp.eq.s32.totalorder %s16, 0
    %p151 = por %p149, %p150
    %p152 = scmp.le.s32.totalorder 1, %s10
    %p153 = scmp.lt.s32.totalorder %s10, 3
    %p154 = pnand %p152, %p153
    %p155 = pneg %p154
    // Predicated region
    $region9: #{gcn_forward.2} parent=5 // pred_check
      _
    $region10: #{gcn_forward.2} parent=5 // pred_check_branch
      %157 = sbr.rel (%p154) target = $region12
    $region11: #{gcn_forward.2} parent=5 // pred_region
      %s158 = ssub.s32 %s10, 1
      // Predicated region
      $region13: #{gcn_forward.2} parent=11 // pred_check
        %p159 = pneg %p76
      $region14: #{gcn_forward.2} parent=11 // pred_check_branch
        %161 = sbr.rel (%p159) target = $region16
      $region15: #{gcn_forward.2} parent=11 // pred_region
        %s162 = smul.u32 32, %s20
        %p163 = scmp.lt.s32.totalorder %s162, 31
        %s164 = scalar_select %p163, %s162, 31
        %s165 = smul.addr %s164, 4
        %s166 = scalar_lea.vmem %s1, %s165
        %s167 = smul.u32 32, %s20
      $region16: #{gcn_forward.2} parent=11 // pred_fallthru
        _
      // Predicated region
      $region17: #{gcn_forward.2} parent=11 // pred_check
        %p168 = pneg %p97
      $region18: #{gcn_forward.2} parent=11 // pred_check_branch
        %170 = sbr.rel (%p168) target = $region20
      $region19: #{gcn_forward.2} parent=11 // pred_region
        _
      $region20: #{gcn_forward.2} parent=11 // pred_fallthru
        _
      // Predicated region
      $region21: #{gcn_forward.2} parent=11 // pred_check
        %p171 = pneg %p118
      $region22: #{gcn_forward.2} parent=11 // pred_check_branch
        %173 = sbr.rel (%p171) target = $region24
      $region23: #{gcn_forward.2} parent=11 // pred_region
        _
      $region24: #{gcn_forward.2} parent=11 // pred_fallthru
        _
    $region12: #{gcn_forward.2} parent=5 // pred_fallthru
      _
    %p174 = scmp.lt.s32.totalorder %s10, 2
    // Predicated region
    $region25: #{gcn_forward.2} parent=5 // pred_check
      %p175 = pneg %p174
    $region26: #{gcn_forward.2} parent=5 // pred_check_branch
      %177 = sbr.rel (%p175) target = $region28
    $region27: #{gcn_forward.2} parent=5 // pred_region
      // Predicated region
      $region29: #{gcn_forward.2} parent=27 // pred_check
        %p178 = pneg %p44
      $region30: #{gcn_forward.2} parent=27 // pred_check_branch
        %180 = sbr.rel (%p178) target = $region32
      $region31: #{gcn_forward.2} parent=27 // pred_region
        %s181 = smul.u32 16, %s17
        %s182 = smul.u32 2, %s18
        %p183 = scmp.lt.s32.totalorder %s181, 31
        %s184 = scalar_select %p183, %s181, 31
        %p185 = scmp.lt.s32.totalorder %s182, 1
        %s186 = scalar_select %p185, %s182, 1
        %s187 = smul.addr %s184, 2
        %s188 = sadd.s32 %s186, %s187
        %s189 = smul.addr %s188, 4
        %s190 = scalar_lea.vmem %s0, %s189
        %s191 = smul.u32 16, %s17
        %s192 = smul.u32 2, %s18
      $region32: #{gcn_forward.2} parent=27 // pred_fallthru
        _
    $region28: #{gcn_forward.2} parent=5 // pred_fallthru
      _
    %p193 = scmp.le.s32.totalorder 1, %s10
    %p194 = scmp.lt.s32.totalorder %s10, 3
    %p195 = pnand %p193, %p194
    %p196 = pneg %p195
    // Predicated region
    $region33: #{gcn_forward.2} parent=5 // pred_check
      _
    $region34: #{gcn_forward.2} parent=5 // pred_check_branch
      %198 = sbr.rel (%p195) target = $region36
    $region35: #{gcn_forward.2} parent=5 // pred_region
      %s199 = ssub.s32 %s10, 1
      %s200 = smul.u32 16, %s19
      %s201 = smul.u32 2, %s20
      %p202 = scmp.lt.s32.totalorder %s200, 31
      %s203 = scalar_select %p202, %s200, 31
      %p204 = scmp.lt.s32.totalorder %s201, 1
      %s205 = scalar_select %p204, %s201, 1
      %s206 = smul.addr %s203, 2
      %s207 = sadd.s32 %s205, %s206
      %s208 = smul.addr %s207, 4
      %s209 = scalar_lea.vmem %s0, %s208
      %p210 = pneg %p50
      %p211 = pneg %p47
      %s212 = smul.u32 32, %s20
      %p213 = scmp.lt.s32.totalorder %s212, 31
      %s214 = scalar_select %p213, %s212, 31
      %s215 = smul.addr %s214, 4
      %s216 = scalar_lea.vmem %s1, %s215
      %p217 = pneg %p76
      %p218 = pneg %p73
      %p219 = pneg %p97
      %p220 = pneg %p94
      %p221 = pneg %p118
      %p222 = pneg %p115
      %p223 = pneg %p144
      %p224 = pneg %p141
      %s225 = smul.u32 16, %s19
      %p226 = scmp.lt.s32.totalorder %s225, 31
      %s227 = scalar_select %p226, %s225, 31
      %s228 = smul.addr %s227, 4
      %s229 = scalar_lea.vmem %s4, %s228
      %s230 = smul.u32 16, %s19
      %s231 = smul.u32 2, %s20
      %p232 = scmp.lt.s32.totalorder %s230, 31
      %s233 = scalar_select %p232, %s230, 31
      %p234 = scmp.lt.s32.totalorder %s231, 1
      %s235 = scalar_select %p234, %s231, 1
      %s236 = smul.addr %s233, 2
      %s237 = sadd.s32 %s235, %s236
      %s238 = smul.addr %s237, 4
      %s239 = scalar_lea.vmem %s0, %s238
      %s240 = smul.u32 16, %s19
      %s241 = smul.u32 2, %s20
      %s242 = smul.u32 32, %s20
      %p243 = scmp.lt.s32.totalorder %s242, 31
      %s244 = scalar_select %p243, %s242, 31
      %s245 = smul.addr %s244, 4
      %s246 = scalar_lea.vmem %s1, %s245
      %s247 = smul.u32 32, %s20
      %s248 = smul.u32 16, %s19
      %p249 = scmp.lt.s32.totalorder %s248, 31
      %s250 = scalar_select %p249, %s248, 31
      %s251 = smul.addr %s250, 4
      %s252 = scalar_lea.vmem %s4, %s251
      %s253 = smul.u32 16, %s19
      %p254 = scmp.eq.s32.totalorder %s20, 0
      // Predicated region
      $region37: #{gcn_forward.2} parent=35 // pred_check
        %p255 = pneg %p254
      $region38: #{gcn_forward.2} parent=35 // pred_check_branch
        %257 = sbr.rel (%p255) target = $region40
      $region39: #{gcn_forward.2} parent=35 // pred_region
        %258 = vst [vmem:[#allocation2] sm:$0xff] 0.0
        %259 = vst [vmem:[#allocation2 + $0x8] sm:$0xff] 0.0
        %260 = vst [vmem:[#allocation2 + $0x10] sm:$0xff] 0.0
        %261 = vst [vmem:[#allocation2 + $0x18] sm:$0xff] 0.0
        %262 = vst [vmem:[#allocation2 + $0x20] sm:$0xff] 0.0
        %263 = vst [vmem:[#allocation2 + $0x28] sm:$0xff] 0.0
        %264 = vst [vmem:[#allocation2 + $0x30] sm:$0xff] 0.0
        %265 = vst [vmem:[#allocation2 + $0x38] sm:$0xff] 0.0
        %266 = vst [vmem:[#allocation2 + $0x40] sm:$0xff] 0.0
        %267 = vst [vmem:[#allocation2 + $0x48] sm:$0xff] 0.0
        %268 = vst [vmem:[#allocation2 + $0x50] sm:$0xff] 0.0
        %269 = vst [vmem:[#allocation2 + $0x58] sm:$0xff] 0.0
        %270 = vst [vmem:[#allocation2 + $0x60] sm:$0xff] 0.0
        %271 = vst [vmem:[#allocation2 + $0x68] sm:$0xff] 0.0
        %272 = vst [vmem:[#allocation2 + $0x70] sm:$0xff] 0.0
        %273 = vst [vmem:[#allocation2 + $0x78] sm:$0xff] 0.0
      $region40: #{gcn_forward.2} parent=35 // pred_fallthru
        _
      %v274 = vld [vmem:[#allocation2] sm:$0xff]
      %v275 = vld [vmem:[#allocation2 + $0x8] sm:$0xff]
      %v276 = vld [vmem:[#allocation2 + $0x10] sm:$0xff]
      %v277 = vld [vmem:[#allocation2 + $0x18] sm:$0xff]
      %v278 = vld [vmem:[#allocation2 + $0x20] sm:$0xff]
      %v279 = vld [vmem:[#allocation2 + $0x28] sm:$0xff]
      %v280 = vld [vmem:[#allocation2 + $0x30] sm:$0xff]
      %v281 = vld [vmem:[#allocation2 + $0x38] sm:$0xff]
      %v282 = vld [vmem:[#allocation2 + $0x40] sm:$0xff]
      %v283 = vld [vmem:[#allocation2 + $0x48] sm:$0xff]
      %v284 = vld [vmem:[#allocation2 + $0x50] sm:$0xff]
      %v285 = vld [vmem:[#allocation2 + $0x58] sm:$0xff]
      %v286 = vld [vmem:[#allocation2 + $0x60] sm:$0xff]
      %v287 = vld [vmem:[#allocation2 + $0x68] sm:$0xff]
      %v288 = vld [vmem:[#allocation2 + $0x70] sm:$0xff]
      %v289 = vld [vmem:[#allocation2 + $0x78] sm:$0xff]
      %v290 = vld [vmem:[%s239] sm:$0xff]
      %v291 = vld [vmem:[%s239 + $0x8] sm:$0xff]
      %v292 = vld [vmem:[%s239 + $0x10] sm:$0xff]
      %v293 = vld [vmem:[%s239 + $0x18] sm:$0xff]
      %v294 = vld [vmem:[%s239 + $0x20] sm:$0xff]
      %v295 = vld [vmem:[%s239 + $0x28] sm:$0xff]
      %v296 = vld [vmem:[%s239 + $0x30] sm:$0xff]
      %v297 = vld [vmem:[%s239 + $0x38] sm:$0xff]
      %v298 = vld [vmem:[%s239 + $0x40] sm:$0xff]
      %v299 = vld [vmem:[%s239 + $0x48] sm:$0xff]
      %v300 = vld [vmem:[%s239 + $0x50] sm:$0xff]
      %v301 = vld [vmem:[%s239 + $0x58] sm:$0xff]
      %v302 = vld [vmem:[%s239 + $0x60] sm:$0xff]
      %v303 = vld [vmem:[%s239 + $0x68] sm:$0xff]
      %v304 = vld [vmem:[%s239 + $0x70] sm:$0xff]
      %v305 = vld [vmem:[%s239 + $0x78] sm:$0xff]
      %v306 = vld [vmem:[%s246] sm:$0xf]
      %v307 = vld [vmem:[%s246 + $0x4] sm:$0xf]
      %v308 = vld [vmem:[%s246 + $0x8] sm:$0xf]
      %v309 = vld [vmem:[%s246 + $0xc] sm:$0xf]
      %v310 = vld [vmem:[%s246 + $0x10] sm:$0xf]
      %v311 = vld [vmem:[%s246 + $0x14] sm:$0xf]
      %v312 = vld [vmem:[%s246 + $0x18] sm:$0xf]
      %v313 = vld [vmem:[%s246 + $0x1c] sm:$0xf]
      %v314 = vld [vmem:[%s246 + $0x20] sm:$0xf]
      %v315 = vld [vmem:[%s246 + $0x24] sm:$0xf]
      %v316 = vld [vmem:[%s246 + $0x28] sm:$0xf]
      %v317 = vld [vmem:[%s246 + $0x2c] sm:$0xf]
      %v318 = vld [vmem:[%s246 + $0x30] sm:$0xf]
      %v319 = vld [vmem:[%s246 + $0x34] sm:$0xf]
      %v320 = vld [vmem:[%s246 + $0x38] sm:$0xf]
      %v321 = vld [vmem:[%s246 + $0x3c] sm:$0xf]
      %v322 = vld [vmem:[%s246 + $0x40] sm:$0xf]
      %v323 = vld [vmem:[%s246 + $0x44] sm:$0xf]
      %v324 = vld [vmem:[%s246 + $0x48] sm:$0xf]
      %v325 = vld [vmem:[%s246 + $0x4c] sm:$0xf]
      %v326 = vld [vmem:[%s246 + $0x50] sm:$0xf]
      %v327 = vld [vmem:[%s246 + $0x54] sm:$0xf]
      %v328 = vld [vmem:[%s246 + $0x58] sm:$0xf]
      %v329 = vld [vmem:[%s246 + $0x5c] sm:$0xf]
      %v330 = vld [vmem:[%s246 + $0x60] sm:$0xf]
      %v331 = vld [vmem:[%s246 + $0x64] sm:$0xf]
      %v332 = vld [vmem:[%s246 + $0x68] sm:$0xf]
      %v333 = vld [vmem:[%s246 + $0x6c] sm:$0xf]
      %v334 = vld [vmem:[%s246 + $0x70] sm:$0xf]
      %v335 = vld [vmem:[%s246 + $0x74] sm:$0xf]
      %v336 = vld [vmem:[%s246 + $0x78] sm:$0xf]
      %v337 = vld [vmem:[%s246 + $0x7c] sm:$0xf]
      %v354 = vunpack.c.l.b16 %v290
      %v355 = vunpack.c.h.b16 %v290
      %v356 = vunpack.c.l.b16 %v291
      %v357 = vunpack.c.h.b16 %v291
      %v358 = vunpack.c.l.b16 %v292
      %v359 = vunpack.c.h.b16 %v292
      %v360 = vunpack.c.l.b16 %v293
      %v361 = vunpack.c.h.b16 %v293
      %v362 = vunpack.c.l.b16 %v294
      %v363 = vunpack.c.h.b16 %v294
      %v364 = vunpack.c.l.b16 %v295
      %v365 = vunpack.c.h.b16 %v295
      %v366 = vunpack.c.l.b16 %v296
      %v367 = vunpack.c.h.b16 %v296
      %v368 = vunpack.c.l.b16 %v297
      %v369 = vunpack.c.h.b16 %v297
      %v370 = vunpack.c.l.b16 %v298
      %v371 = vunpack.c.h.b16 %v298
      %v372 = vunpack.c.l.b16 %v299
      %v373 = vunpack.c.h.b16 %v299
      %v374 = vunpack.c.l.b16 %v300
      %v375 = vunpack.c.h.b16 %v300
      %v376 = vunpack.c.l.b16 %v301
      %v377 = vunpack.c.h.b16 %v301
      %v378 = vunpack.c.l.b16 %v302
      %v379 = vunpack.c.h.b16 %v302
      %v380 = vunpack.c.l.b16 %v303
      %v381 = vunpack.c.h.b16 %v303
      %v382 = vunpack.c.l.b16 %v304
      %v383 = vunpack.c.h.b16 %v304
      %v384 = vunpack.c.l.b16 %v305
      %v385 = vunpack.c.h.b16 %v305
      %v386 = vpack.c.b16 %v356, %v354
      %v387 = vpack.c.b16 %v357, %v355
      %v388 = vpack.c.b16 %v360, %v358
      %v389 = vpack.c.b16 %v361, %v359
      %v390 = vpack.c.b16 %v364, %v362
      %v391 = vpack.c.b16 %v365, %v363
      %v392 = vpack.c.b16 %v368, %v366
      %v393 = vpack.c.b16 %v369, %v367
      %v394 = vpack.c.b16 %v372, %v370
      %v395 = vpack.c.b16 %v373, %v371
      %v396 = vpack.c.b16 %v376, %v374
      %v397 = vpack.c.b16 %v377, %v375
      %v398 = vpack.c.b16 %v380, %v378
      %v399 = vpack.c.b16 %v381, %v379
      %v400 = vpack.c.b16 %v384, %v382
      %v401 = vpack.c.b16 %v385, %v383
      %v450 = vunpack.c.l.b16 %v306
      %v451 = vunpack.c.l.b16 %v307
      %v452 = vunpack.c.l.b16 %v308
      %v453 = vunpack.c.l.b16 %v309
      %v454 = vunpack.c.l.b16 %v310
      %v455 = vunpack.c.l.b16 %v311
      %v456 = vunpack.c.l.b16 %v312
      %v457 = vunpack.c.l.b16 %v313
      %v458 = vunpack.c.l.b16 %v314
      %v459 = vunpack.c.l.b16 %v315
      %v460 = vunpack.c.l.b16 %v316
      %v461 = vunpack.c.l.b16 %v317
      %v462 = vunpack.c.l.b16 %v318
      %v463 = vunpack.c.l.b16 %v319
      %v464 = vunpack.c.l.b16 %v320
      %v465 = vunpack.c.l.b16 %v321
      %v466 = vunpack.c.l.b16 %v322
      %v467 = vunpack.c.l.b16 %v323
      %v468 = vunpack.c.l.b16 %v324
      %v469 = vunpack.c.l.b16 %v325
      %v470 = vunpack.c.l.b16 %v326
      %v471 = vunpack.c.l.b16 %v327
      %v472 = vunpack.c.l.b16 %v328
      %v473 = vunpack.c.l.b16 %v329
      %v474 = vunpack.c.l.b16 %v330
      %v475 = vunpack.c.l.b16 %v331
      %v476 = vunpack.c.l.b16 %v332
      %v477 = vunpack.c.l.b16 %v333
      %v478 = vunpack.c.l.b16 %v334
      %v479 = vunpack.c.l.b16 %v335
      %v480 = vunpack.c.l.b16 %v336
      %v481 = vunpack.c.l.b16 %v337
      %v482 = vpack.c.b16 %v451, %v450
      %v483 = vpack.c.b16 %v453, %v452
      %v484 = vpack.c.b16 %v455, %v454
      %v485 = vpack.c.b16 %v457, %v456
      %v486 = vpack.c.b16 %v459, %v458
      %v487 = vpack.c.b16 %v461, %v460
      %v488 = vpack.c.b16 %v463, %v462
      %v489 = vpack.c.b16 %v465, %v464
      %v490 = vpack.c.b16 %v467, %v466
      %v491 = vpack.c.b16 %v469, %v468
      %v492 = vpack.c.b16 %v471, %v470
      %v493 = vpack.c.b16 %v473, %v472
      %v494 = vpack.c.b16 %v475, %v474
      %v495 = vpack.c.b16 %v477, %v476
      %v496 = vpack.c.b16 %v479, %v478
      %v497 = vpack.c.b16 %v481, %v480
      %514 = vmatpush.bf16.msra.mxu0 %v489
      %515 = vmatpush.bf16.msra.mxu0 %v488
      %516 = vmatpush.bf16.msra.mxu0 %v487
      %517 = vmatpush.bf16.msra.mxu0 %v486
      %518 = vmatpush.bf16.msra.mxu0 %v485
      %519 = vmatpush.bf16.msra.mxu0 %v484
      %520 = vmatpush.bf16.msra.mxu0 %v483
      %521 = vmatpush.bf16.msra.mxu0 %v482
      %522 = vmatmul.bf16.gmra.mxu0 %v386
      %v523 = vpop.f32.mrf.mxu0
      %v524 = vadd.f32 0.0, %v523
      %v525 = vpop.f32.mrf.mxu0
      %v526 = vadd.f32 0.0, %v525
      %527 = vmatmul.bf16.gmra.mxu0 %v388
      %v528 = vpop.f32.mrf.mxu0
      %v529 = vadd.f32 0.0, %v528
      %v530 = vpop.f32.mrf.mxu0
      %v531 = vadd.f32 0.0, %v530
      %532 = vmatmul.bf16.gmra.mxu0 %v390
      %v533 = vpop.f32.mrf.mxu0
      %v534 = vadd.f32 0.0, %v533
      %v535 = vpop.f32.mrf.mxu0
      %v536 = vadd.f32 0.0, %v535
      %537 = vmatmul.bf16.gmra.mxu0 %v392
      %v538 = vpop.f32.mrf.mxu0
      %v539 = vadd.f32 0.0, %v538
      %v540 = vpop.f32.mrf.mxu0
      %v541 = vadd.f32 0.0, %v540
      %542 = vmatmul.bf16.gmra.mxu0 %v394
      %v543 = vpop.f32.mrf.mxu0
      %v544 = vadd.f32 0.0, %v543
      %v545 = vpop.f32.mrf.mxu0
      %v546 = vadd.f32 0.0, %v545
      %547 = vmatmul.bf16.gmra.mxu0 %v396
      %v548 = vpop.f32.mrf.mxu0
      %v549 = vadd.f32 0.0, %v548
      %v550 = vpop.f32.mrf.mxu0
      %v551 = vadd.f32 0.0, %v550
      %552 = vmatmul.bf16.gmra.mxu0 %v398
      %v553 = vpop.f32.mrf.mxu0
      %v554 = vadd.f32 0.0, %v553
      %v555 = vpop.f32.mrf.mxu0
      %v556 = vadd.f32 0.0, %v555
      %557 = vmatmul.bf16.gmra.mxu0 %v400
      %v558 = vpop.f32.mrf.mxu0
      %v559 = vadd.f32 0.0, %v558
      %v560 = vpop.f32.mrf.mxu0
      %v561 = vadd.f32 0.0, %v560
      %562 = vdwg.mxu0
      %563 = vmatpush.bf16.msra.mxu0 %v497
      %564 = vmatpush.bf16.msra.mxu0 %v496
      %565 = vmatpush.bf16.msra.mxu0 %v495
      %566 = vmatpush.bf16.msra.mxu0 %v494
      %567 = vmatpush.bf16.msra.mxu0 %v493
      %568 = vmatpush.bf16.msra.mxu0 %v492
      %569 = vmatpush.bf16.msra.mxu0 %v491
      %570 = vmatpush.bf16.msra.mxu0 %v490
      %571 = vmatmul.bf16.gmra.mxu0 %v387
      %v572 = vpop.f32.mrf.mxu0
      %v573 = vadd.f32 %v524, %v572
      %v574 = vpop.f32.mrf.mxu0
      %v575 = vadd.f32 %v526, %v574
      %576 = vmatmul.bf16.gmra.mxu0 %v389
      %v577 = vpop.f32.mrf.mxu0
      %v578 = vadd.f32 %v529, %v577
      %v579 = vpop.f32.mrf.mxu0
      %v580 = vadd.f32 %v531, %v579
      %581 = vmatmul.bf16.gmra.mxu0 %v391
      %v582 = vpop.f32.mrf.mxu0
      %v583 = vadd.f32 %v534, %v582
      %v584 = vpop.f32.mrf.mxu0
      %v585 = vadd.f32 %v536, %v584
      %586 = vmatmul.bf16.gmra.mxu0 %v393
      %v587 = vpop.f32.mrf.mxu0
      %v588 = vadd.f32 %v539, %v587
      %v589 = vpop.f32.mrf.mxu0
      %v590 = vadd.f32 %v541, %v589
      %591 = vmatmul.bf16.gmra.mxu0 %v395
      %v592 = vpop.f32.mrf.mxu0
      %v593 = vadd.f32 %v544, %v592
      %v594 = vpop.f32.mrf.mxu0
      %v595 = vadd.f32 %v546, %v594
      %596 = vmatmul.bf16.gmra.mxu0 %v397
      %v597 = vpop.f32.mrf.mxu0
      %v598 = vadd.f32 %v549, %v597
      %v599 = vpop.f32.mrf.mxu0
      %v600 = vadd.f32 %v551, %v599
      %601 = vmatmul.bf16.gmra.mxu0 %v399
      %v602 = vpop.f32.mrf.mxu0
      %v603 = vadd.f32 %v554, %v602
      %v604 = vpop.f32.mrf.mxu0
      %v605 = vadd.f32 %v556, %v604
      %606 = vmatmul.bf16.gmra.mxu0 %v401
      %v607 = vpop.f32.mrf.mxu0
      %v608 = vadd.f32 %v559, %v607
      %v609 = vpop.f32.mrf.mxu0
      %v610 = vadd.f32 %v561, %v609
      %611 = vdwg.mxu0
      %v612 = vadd.f32 %v274, %v573
      %v613 = vadd.f32 %v275, %v575
      %v614 = vadd.f32 %v276, %v578
      %v615 = vadd.f32 %v277, %v580
      %v616 = vadd.f32 %v278, %v583
      %v617 = vadd.f32 %v279, %v585
      %v618 = vadd.f32 %v280, %v588
      %v619 = vadd.f32 %v281, %v590
      %v620 = vadd.f32 %v282, %v593
      %v621 = vadd.f32 %v283, %v595
      %v622 = vadd.f32 %v284, %v598
      %v623 = vadd.f32 %v285, %v600
      %v624 = vadd.f32 %v286, %v603
      %v625 = vadd.f32 %v287, %v605
      %v626 = vadd.f32 %v288, %v608
      %v627 = vadd.f32 %v289, %v610
      %628 = vst [vmem:[#allocation2] sm:$0xff] %v612
      %629 = vst [vmem:[#allocation2 + $0x8] sm:$0xff] %v613
      %630 = vst [vmem:[#allocation2 + $0x10] sm:$0xff] %v614
      %631 = vst [vmem:[#allocation2 + $0x18] sm:$0xff] %v615
      %632 = vst [vmem:[#allocation2 + $0x20] sm:$0xff] %v616
      %633 = vst [vmem:[#allocation2 + $0x28] sm:$0xff] %v617
      %634 = vst [vmem:[#allocation2 + $0x30] sm:$0xff] %v618
      %635 = vst [vmem:[#allocation2 + $0x38] sm:$0xff] %v619
      %636 = vst [vmem:[#allocation2 + $0x40] sm:$0xff] %v620
      %637 = vst [vmem:[#allocation2 + $0x48] sm:$0xff] %v621
      %638 = vst [vmem:[#allocation2 + $0x50] sm:$0xff] %v622
      %639 = vst [vmem:[#allocation2 + $0x58] sm:$0xff] %v623
      %640 = vst [vmem:[#allocation2 + $0x60] sm:$0xff] %v624
      %641 = vst [vmem:[#allocation2 + $0x68] sm:$0xff] %v625
      %642 = vst [vmem:[#allocation2 + $0x70] sm:$0xff] %v626
      %643 = vst [vmem:[#allocation2 + $0x78] sm:$0xff] %v627
      // Predicated region
      $region41: #{gcn_forward.2} parent=35 // pred_check
        %p644 = pneg %p254
      $region42: #{gcn_forward.2} parent=35 // pred_check_branch
        %646 = sbr.rel (%p644) target = $region44
      $region43: #{gcn_forward.2} parent=35 // pred_region
        %v647 = vld [vmem:[#allocation2] sm:$0xff]
        %v648 = vld [vmem:[#allocation2 + $0x8] sm:$0xff]
        %v649 = vld [vmem:[#allocation2 + $0x10] sm:$0xff]
        %v650 = vld [vmem:[#allocation2 + $0x18] sm:$0xff]
        %v651 = vld [vmem:[#allocation2 + $0x20] sm:$0xff]
        %v652 = vld [vmem:[#allocation2 + $0x28] sm:$0xff]
        %v653 = vld [vmem:[#allocation2 + $0x30] sm:$0xff]
        %v654 = vld [vmem:[#allocation2 + $0x38] sm:$0xff]
        %v655 = vld [vmem:[#allocation2 + $0x40] sm:$0xff]
        %v656 = vld [vmem:[#allocation2 + $0x48] sm:$0xff]
        %v657 = vld [vmem:[#allocation2 + $0x50] sm:$0xff]
        %v658 = vld [vmem:[#allocation2 + $0x58] sm:$0xff]
        %v659 = vld [vmem:[#allocation2 + $0x60] sm:$0xff]
        %v660 = vld [vmem:[#allocation2 + $0x68] sm:$0xff]
        %v661 = vld [vmem:[#allocation2 + $0x70] sm:$0xff]
        %v662 = vld [vmem:[#allocation2 + $0x78] sm:$0xff]
        %v663 = vld [vmem:[%s2] sm:$0x1]
        %v665 = vperm.slane %v663, 0
        %v667 = vadd.f32 %v647, %v665
        %v668 = vadd.f32 %v648, %v665
        %v669 = vadd.f32 %v649, %v665
        %v670 = vadd.f32 %v650, %v665
        %v671 = vadd.f32 %v651, %v665
        %v672 = vadd.f32 %v652, %v665
        %v673 = vadd.f32 %v653, %v665
        %v674 = vadd.f32 %v654, %v665
        %v675 = vadd.f32 %v655, %v665
        %v676 = vadd.f32 %v656, %v665
        %v677 = vadd.f32 %v657, %v665
        %v678 = vadd.f32 %v658, %v665
        %v679 = vadd.f32 %v659, %v665
        %v680 = vadd.f32 %v660, %v665
        %v681 = vadd.f32 %v661, %v665
        %v682 = vadd.f32 %v662, %v665
        %v683 = vmax.f32 %v667, 0.0
        %v684 = vmax.f32 %v668, 0.0
        %v685 = vmax.f32 %v669, 0.0
        %v686 = vmax.f32 %v670, 0.0
        %v687 = vmax.f32 %v671, 0.0
        %v688 = vmax.f32 %v672, 0.0
        %v689 = vmax.f32 %v673, 0.0
        %v690 = vmax.f32 %v674, 0.0
        %v691 = vmax.f32 %v675, 0.0
        %v692 = vmax.f32 %v676, 0.0
        %v693 = vmax.f32 %v677, 0.0
        %v694 = vmax.f32 %v678, 0.0
        %v695 = vmax.f32 %v679, 0.0
        %v696 = vmax.f32 %v680, 0.0
        %v697 = vmax.f32 %v681, 0.0
        %v698 = vmax.f32 %v682, 0.0
        %v699 = vpack.c.bf16 %v684, %v683
        %v700 = vpack.c.bf16 %v686, %v685
        %v701 = vpack.c.bf16 %v688, %v687
        %v702 = vpack.c.bf16 %v690, %v689
        %v703 = vpack.c.bf16 %v692, %v691
        %v704 = vpack.c.bf16 %v694, %v693
        %v705 = vpack.c.bf16 %v696, %v695
        %v706 = vpack.c.bf16 %v698, %v697
        %v707 = vld [vmem:[%s3] sm:$0xf]
        %v708 = vld [vmem:[%s3 + $0x4] sm:$0xf]
        %v709 = vld [vmem:[%s3 + $0x8] sm:$0xf]
        %v710 = vld [vmem:[%s3 + $0xc] sm:$0xf]
        %v711 = vld [vmem:[%s3 + $0x10] sm:$0xf]
        %v712 = vld [vmem:[%s3 + $0x14] sm:$0xf]
        %v713 = vld [vmem:[%s3 + $0x18] sm:$0xf]
        %v714 = vld [vmem:[%s3 + $0x1c] sm:$0xf]
        %v715 = vld [vmem:[%s3 + $0x20] sm:$0xf]
        %v716 = vld [vmem:[%s3 + $0x24] sm:$0xf]
        %v717 = vld [vmem:[%s3 + $0x28] sm:$0xf]
        %v718 = vld [vmem:[%s3 + $0x2c] sm:$0xf]
        %v719 = vld [vmem:[%s3 + $0x30] sm:$0xf]
        %v720 = vld [vmem:[%s3 + $0x34] sm:$0xf]
        %v721 = vld [vmem:[%s3 + $0x38] sm:$0xf]
        %v722 = vld [vmem:[%s3 + $0x3c] sm:$0xf]
        %v739 = vunpack.c.l.b16 %v707
        %v740 = vunpack.c.l.b16 %v708
        %v741 = vunpack.c.l.b16 %v709
        %v742 = vunpack.c.l.b16 %v710
        %v743 = vunpack.c.l.b16 %v711
        %v744 = vunpack.c.l.b16 %v712
        %v745 = vunpack.c.l.b16 %v713
        %v746 = vunpack.c.l.b16 %v714
        %v747 = vunpack.c.l.b16 %v715
        %v748 = vunpack.c.l.b16 %v716
        %v749 = vunpack.c.l.b16 %v717
        %v750 = vunpack.c.l.b16 %v718
        %v751 = vunpack.c.l.b16 %v719
        %v752 = vunpack.c.l.b16 %v720
        %v753 = vunpack.c.l.b16 %v721
        %v754 = vunpack.c.l.b16 %v722
        %v755 = vpack.c.b16 %v740, %v739
        %v756 = vpack.c.b16 %v742, %v741
        %v757 = vpack.c.b16 %v744, %v743
        %v758 = vpack.c.b16 %v746, %v745
        %v759 = vpack.c.b16 %v748, %v747
        %v760 = vpack.c.b16 %v750, %v749
        %v761 = vpack.c.b16 %v752, %v751
        %v762 = vpack.c.b16 %v754, %v753
        %771 = vmatpush.bf16.msra.mxu0 %v762
        %772 = vmatpush.bf16.msra.mxu0 %v761
        %773 = vmatpush.bf16.msra.mxu0 %v760
        %774 = vmatpush.bf16.msra.mxu0 %v759
        %775 = vmatpush.bf16.msra.mxu0 %v758
        %776 = vmatpush.bf16.msra.mxu0 %v757
        %777 = vmatpush.bf16.msra.mxu0 %v756
        %778 = vmatpush.bf16.msra.mxu0 %v755
        %779 = vmatmul.bf16.gmra.mxu0 %v699
        %v780 = vpop.f32.mrf.mxu0
        %v781 = vadd.f32 0.0, %v780
        %v782 = vpop.f32.mrf.mxu0
        %v783 = vadd.f32 0.0, %v782
        %784 = vmatmul.bf16.gmra.mxu0 %v700
        %v785 = vpop.f32.mrf.mxu0
        %v786 = vadd.f32 0.0, %v785
        %v787 = vpop.f32.mrf.mxu0
        %v788 = vadd.f32 0.0, %v787
        %789 = vmatmul.bf16.gmra.mxu0 %v701
        %v790 = vpop.f32.mrf.mxu0
        %v791 = vadd.f32 0.0, %v790
        %v792 = vpop.f32.mrf.mxu0
        %v793 = vadd.f32 0.0, %v792
        %794 = vmatmul.bf16.gmra.mxu0 %v702
        %v795 = vpop.f32.mrf.mxu0
        %v796 = vadd.f32 0.0, %v795
        %v797 = vpop.f32.mrf.mxu0
        %v798 = vadd.f32 0.0, %v797
        %799 = vmatmul.bf16.gmra.mxu0 %v703
        %v800 = vpop.f32.mrf.mxu0
        %v801 = vadd.f32 0.0, %v800
        %v802 = vpop.f32.mrf.mxu0
        %v803 = vadd.f32 0.0, %v802
        %804 = vmatmul.bf16.gmra.mxu0 %v704
        %v805 = vpop.f32.mrf.mxu0
        %v806 = vadd.f32 0.0, %v805
        %v807 = vpop.f32.mrf.mxu0
        %v808 = vadd.f32 0.0, %v807
        %809 = vmatmul.bf16.gmra.mxu0 %v705
        %v810 = vpop.f32.mrf.mxu0
        %v811 = vadd.f32 0.0, %v810
        %v812 = vpop.f32.mrf.mxu0
        %v813 = vadd.f32 0.0, %v812
        %814 = vmatmul.bf16.gmra.mxu0 %v706
        %v815 = vpop.f32.mrf.mxu0
        %v816 = vadd.f32 0.0, %v815
        %v817 = vpop.f32.mrf.mxu0
        %v818 = vadd.f32 0.0, %v817
        %819 = vdwg.mxu0
        %v820 = vpack.c.bf16 %v781, %v781
        %v821 = vpack.c.bf16 %v783, %v783
        %v822 = vpack.c.bf16 %v786, %v786
        %v823 = vpack.c.bf16 %v788, %v788
        %v824 = vpack.c.bf16 %v791, %v791
        %v825 = vpack.c.bf16 %v793, %v793
        %v826 = vpack.c.bf16 %v796, %v796
        %v827 = vpack.c.bf16 %v798, %v798
        %v828 = vpack.c.bf16 %v801, %v801
        %v829 = vpack.c.bf16 %v803, %v803
        %v830 = vpack.c.bf16 %v806, %v806
        %v831 = vpack.c.bf16 %v808, %v808
        %v832 = vpack.c.bf16 %v811, %v811
        %v833 = vpack.c.bf16 %v813, %v813
        %v834 = vpack.c.bf16 %v816, %v816
        %v835 = vpack.c.bf16 %v818, %v818
        %836 = vst [vmem:[%s252] sm:$0xf] %v820
        %837 = vst [vmem:[%s252 + $0x4] sm:$0xf] %v821
        %838 = vst [vmem:[%s252 + $0x8] sm:$0xf] %v822
        %839 = vst [vmem:[%s252 + $0xc] sm:$0xf] %v823
        %840 = vst [vmem:[%s252 + $0x10] sm:$0xf] %v824
        %841 = vst [vmem:[%s252 + $0x14] sm:$0xf] %v825
        %842 = vst [vmem:[%s252 + $0x18] sm:$0xf] %v826
        %843 = vst [vmem:[%s252 + $0x1c] sm:$0xf] %v827
        %844 = vst [vmem:[%s252 + $0x20] sm:$0xf] %v828
        %845 = vst [vmem:[%s252 + $0x24] sm:$0xf] %v829
        %846 = vst [vmem:[%s252 + $0x28] sm:$0xf] %v830
        %847 = vst [vmem:[%s252 + $0x2c] sm:$0xf] %v831
        %848 = vst [vmem:[%s252 + $0x30] sm:$0xf] %v832
        %849 = vst [vmem:[%s252 + $0x34] sm:$0xf] %v833
        %850 = vst [vmem:[%s252 + $0x38] sm:$0xf] %v834
        %851 = vst [vmem:[%s252 + $0x3c] sm:$0xf] %v835
      $region44: #{gcn_forward.2} parent=35 // pred_fallthru
        _
      %s852 = smul.u32 16, %s19
      %p853 = scmp.lt.s32.totalorder %s852, 31
      %s854 = scalar_select %p853, %s852, 31
      %s855 = smul.addr %s854, 4
      %s856 = scalar_lea.vmem %s4, %s855
      // Predicated region
      $region45: #{gcn_forward.2} parent=35 // pred_check
        %p857 = pneg %p141
      $region46: #{gcn_forward.2} parent=35 // pred_check_branch
        %859 = sbr.rel (%p857) target = $region48
      $region47: #{gcn_forward.2} parent=35 // pred_region
        %s860 = smul.u32 16, %s19
      $region48: #{gcn_forward.2} parent=35 // pred_fallthru
        _
    $region36: #{gcn_forward.2} parent=5 // pred_fallthru
      _
    %p861 = scmp.le.s32.totalorder 2, %s10
    // Predicated region
    $region49: #{gcn_forward.2} parent=5 // pred_check
      %p862 = pneg %p861
    $region50: #{gcn_forward.2} parent=5 // pred_check_branch
      %864 = sbr.rel (%p862) target = $region52
    $region51: #{gcn_forward.2} parent=5 // pred_region
      %s865 = ssub.s32 %s10, 2
      // Predicated region
      $region53: #{gcn_forward.2} parent=51 // pred_check
        %p866 = pneg %p147
      $region54: #{gcn_forward.2} parent=51 // pred_check_branch
        %868 = sbr.rel (%p866) target = $region56
      $region55: #{gcn_forward.2} parent=51 // pred_region
        %s869 = smul.u32 16, %s21
        %p870 = scmp.lt.s32.totalorder %s869, 31
        %s871 = scalar_select %p870, %s869, 31
        %s872 = smul.addr %s871, 4
        %s873 = scalar_lea.vmem %s4, %s872
      $region56: #{gcn_forward.2} parent=51 // pred_fallthru
        _
    $region52: #{gcn_forward.2} parent=5 // pred_fallthru
      _
  $region6: #{gcn_forward.2} parent=0 // loop_footer
    %s14 = sadd.s32 1, %s10
  $region7: #{gcn_forward.2} parent=0 // loop_footer_branch
    %9 = sbr.rel target = $region3
  $region8: #{gcn_forward.2} parent=0 // loop_exit
    _

// kernel: gcn_forward.3
$region0: #{gcn_forward.3}
  #allocation0 [shape = 'u32[]', space=smem, size = 0x4, offset = 0x4, fixed_abs, tag = 'smem constant byte address 0x4 - core index']
  #allocation1 [shape = 'u32[72,128]{1,0:T(1,128)}', space=vmem, size = 0x9000, scoped, tag = 'internal scratch']
  #allocation2 [shape = 'f32[128,128]{1,0:T(8,128)}', space=vmem, size = 0x10000, scoped, tag = 'scratch operand']
  %s0 = inlined_call_operand.vmem [shape: bf16[256,256], index: 0, kind: input, shape index: {}]
  %s1 = inlined_call_operand.vmem [shape: bf16[256,128], index: 1, kind: input, shape index: {}]
  %s2 = inlined_call_operand.vmem [shape: f32[1,128], index: 2, kind: input, shape index: {}]
  %s3 = inlined_call_operand.vmem [shape: f32[256,128], index: 3, kind: output, shape index: {}]
  %s4 = sld [smem:[#allocation0]]
  $region53: #{gcn_forward.3} parent=0
    _
  %s6 = ssub.s32 1, %s4
  %s7 = scalar_select 0, %s6, %s4
  loop: start=0, step=1, limit=4
  $region2: #{gcn_forward.3} parent=0 // loop_pre_header
    _
  $region3: #{gcn_forward.3} parent=0 // loop_header
    %s9 = sphi 0, %s13
    %p10 = scmp.ge.s32.totalorder %s9, 4
    %s16 = sphi 0, %s28
    %s17 = sphi 0, %s24
    %s18 = sphi 0, %s16
    %s19 = sphi 0, %s17
    %s20 = sphi 0, %s18
    %s21 = sphi 0, %s19
    %s33 = sphi 0, %s35
    %s36 = sphi 0, %s33
    %s37 = sphi 0, %s36
    %s53 = sphi 0, %s37
    %s59 = sphi 0, %s61
    %s62 = sphi 0, %s59
    %s63 = sphi 0, %s62
    %s79 = sphi 0, %s63
    %s83 = sphi 0, %s83
    %s85 = sphi 0, %s83
    %s86 = sphi 0, %s85
    %s100 = sphi 0, %s86
    %s106 = sphi 0, %s108
    %s109 = sphi 0, %s106
    %s110 = sphi 0, %s109
    %s126 = sphi 0, %s110
  $region4: #{gcn_forward.3} parent=0 // loop_header_branch
    %12 = sbr.rel (%p10) target = $region8
  $region5: #{gcn_forward.3} parent=0 // loop_body
    %s14 = ssub.s32 %s9, 1
    %s15 = ssub.s32 %s9, 2
    %s22 = sadd.s32 1, %s17
    %p23 = scmp.ge.s32.totalorder %s22, 1
    %s24 = scalar_select %p23, 0, %s22
    %s25 = sadd.s32 1, %s16
    %s26 = scalar_select %p23, %s25, %s16
    %p27 = scmp.ge.s32.totalorder %s26, 2
    %s28 = scalar_select %p27, 0, %s26
    %s29 = ssub.s32 %s16, %s28
    %s30 = ssub.s32 %s17, %s24
    %s31 = sor.u32 %s29, %s30
    %p32 = scmp.eq.s32.totalorder %s31, 0
    %s34 = sadd.s32 %s33, 1
    %s35 = scalar_select %p32, %s33, %s34
    %p38 = pneg %p32
    %p39 = scmp.eq.s32.totalorder %s9, 1
    %p40 = por %p38, %p39
    %p41 = scmp.ne.s32.totalorder %s33, %s36
    %p42 = scmp.eq.s32.totalorder %s9, 0
    %p43 = por %p41, %p42
    %p44 = scmp.ne.s32.totalorder %s33, %s36
    %p45 = scmp.eq.s32.totalorder %s14, 1
    %p46 = por %p44, %p45
    %p47 = scmp.ne.s32.totalorder %s36, %s37
    %p48 = scmp.eq.s32.totalorder %s14, 0
    %p49 = por %p47, %p48
    %p50 = scmp.ne.s32.totalorder %s36, %s37
    %p51 = scmp.eq.s32.totalorder %s15, 1
    %p52 = por %p50, %p51
    %p54 = scmp.ne.s32.totalorder %s37, %s53
    %p55 = scmp.eq.s32.totalorder %s15, 0
    %p56 = por %p54, %p55
    %s57 = ssub.s32 %s17, %s24
    %p58 = scmp.eq.s32.totalorder %s57, 0
    %s60 = sadd.s32 %s59, 1
    %s61 = scalar_select %p58, %s59, %s60
    %p64 = pneg %p58
    %p65 = scmp.eq.s32.totalorder %s9, 1
    %p66 = por %p64, %p65
    %p67 = scmp.ne.s32.totalorder %s59, %s62
    %p68 = scmp.eq.s32.totalorder %s9, 0
    %p69 = por %p67, %p68
    %p70 = scmp.ne.s32.totalorder %s59, %s62
    %p71 = scmp.eq.s32.totalorder %s14, 1
    %p72 = por %p70, %p71
    %p73 = scmp.ne.s32.totalorder %s62, %s63
    %p74 = scmp.eq.s32.totalorder %s14, 0
    %p75 = por %p73, %p74
    %p76 = scmp.ne.s32.totalorder %s62, %s63
    %p77 = scmp.eq.s32.totalorder %s15, 1
    %p78 = por %p76, %p77
    %p80 = scmp.ne.s32.totalorder %s63, %s79
    %p81 = scmp.eq.s32.totalorder %s15, 0
    %p82 = por %p80, %p81
    %s84 = sadd.s32 %s83, 1
    %p87 = scmp.eq.s32.totalorder %s9, 1
    %p88 = scmp.ne.s32.totalorder %s83, %s85
    %p89 = scmp.eq.s32.totalorder %s9, 0
    %p90 = por %p88, %p89
    %p91 = scmp.ne.s32.totalorder %s83, %s85
    %p92 = scmp.eq.s32.totalorder %s14, 1
    %p93 = por %p91, %p92
    %p94 = scmp.ne.s32.totalorder %s85, %s86
    %p95 = scmp.eq.s32.totalorder %s14, 0
    %p96 = por %p94, %p95
    %p97 = scmp.ne.s32.totalorder %s85, %s86
    %p98 = scmp.eq.s32.totalorder %s15, 1
    %p99 = por %p97, %p98
    %p101 = scmp.ne.s32.totalorder %s86, %s100
    %p102 = scmp.eq.s32.totalorder %s15, 0
    %p103 = por %p101, %p102
    %s104 = ssub.s32 %s16, %s28
    %p105 = scmp.eq.s32.totalorder %s104, 0
    %s107 = sadd.s32 %s106, 1
    %s108 = scalar_select %p105, %s106, %s107
    %p111 = pneg %p105
    %p112 = scmp.eq.s32.totalorder %s9, 1
    %p113 = por %p111, %p112
    %p114 = scmp.ne.s32.totalorder %s106, %s109
    %p115 = scmp.eq.s32.totalorder %s9, 0
    %p116 = por %p114, %p115
    %p117 = scmp.ne.s32.totalorder %s106, %s109
    %p118 = scmp.eq.s32.totalorder %s14, 1
    %p119 = por %p117, %p118
    %p120 = scmp.ne.s32.totalorder %s109, %s110
    %p121 = scmp.eq.s32.totalorder %s14, 0
    %p122 = por %p120, %p121
    %p123 = scmp.ne.s32.totalorder %s109, %s110
    %p124 = scmp.eq.s32.totalorder %s15, 1
    %p125 = por %p123, %p124
    %p127 = scmp.ne.s32.totalorder %s110, %s126
    %p128 = scmp.eq.s32.totalorder %s15, 0
    %p129 = por %p127, %p128
    %p130 = scmp.le.s32.totalorder 1, %s9
    %p131 = scmp.lt.s32.totalorder %s9, 3
    %p132 = pnand %p130, %p131
    %p133 = pneg %p132
    // Predicated region
    $region9: #{gcn_forward.3} parent=5 // pred_check
      _
    $region10: #{gcn_forward.3} parent=5 // pred_check_branch
      %135 = sbr.rel (%p132) target = $region12
    $region11: #{gcn_forward.3} parent=5 // pred_region
      %s136 = ssub.s32 %s9, 1
      // Predicated region
      $region13: #{gcn_forward.3} parent=11 // pred_check
        %p137 = pneg %p75
      $region14: #{gcn_forward.3} parent=11 // pred_check_branch
        %139 = sbr.rel (%p137) target = $region16
      $region15: #{gcn_forward.3} parent=11 // pred_region
        %s140 = smul.u32 32, %s19
        %p141 = scmp.lt.s32.totalorder %s140, 31
        %s142 = scalar_select %p141, %s140, 31
        %s143 = smul.addr %s142, 4
        %s144 = scalar_lea.vmem %s1, %s143
        %s145 = smul.u32 32, %s19
      $region16: #{gcn_forward.3} parent=11 // pred_fallthru
        _
      // Predicated region
      $region17: #{gcn_forward.3} parent=11 // pred_check
        %p146 = pneg %p96
      $region18: #{gcn_forward.3} parent=11 // pred_check_branch
        %148 = sbr.rel (%p146) target = $region20
      $region19: #{gcn_forward.3} parent=11 // pred_region
        _
      $region20: #{gcn_forward.3} parent=11 // pred_fallthru
        _
    $region12: #{gcn_forward.3} parent=5 // pred_fallthru
      _
    %p149 = scmp.lt.s32.totalorder %s9, 2
    // Predicated region
    $region21: #{gcn_forward.3} parent=5 // pred_check
      %p150 = pneg %p149
    $region22: #{gcn_forward.3} parent=5 // pred_check_branch
      %152 = sbr.rel (%p150) target = $region24
    $region23: #{gcn_forward.3} parent=5 // pred_region
      // Predicated region
      $region25: #{gcn_forward.3} parent=23 // pred_check
        %p153 = pneg %p43
      $region26: #{gcn_forward.3} parent=23 // pred_check_branch
        %155 = sbr.rel (%p153) target = $region28
      $region27: #{gcn_forward.3} parent=23 // pred_region
        %s156 = smul.u32 16, %s16
        %s157 = smul.u32 2, %s17
        %p158 = scmp.lt.s32.totalorder %s156, 31
        %s159 = scalar_select %p158, %s156, 31
        %p160 = scmp.lt.s32.totalorder %s157, 1
        %s161 = scalar_select %p160, %s157, 1
        %s162 = smul.addr %s159, 2
        %s163 = sadd.s32 %s161, %s162
        %s164 = smul.addr %s163, 4
        %s165 = scalar_lea.vmem %s0, %s164
        %s166 = smul.u32 16, %s16
        %s167 = smul.u32 2, %s17
      $region28: #{gcn_forward.3} parent=23 // pred_fallthru
        _
    $region24: #{gcn_forward.3} parent=5 // pred_fallthru
      _
    %p168 = scmp.le.s32.totalorder 1, %s9
    %p169 = scmp.lt.s32.totalorder %s9, 3
    %p170 = pnand %p168, %p169
    %p171 = pneg %p170
    // Predicated region
    $region29: #{gcn_forward.3} parent=5 // pred_check
      _
    $region30: #{gcn_forward.3} parent=5 // pred_check_branch
      %173 = sbr.rel (%p170) target = $region32
    $region31: #{gcn_forward.3} parent=5 // pred_region
      %s174 = ssub.s32 %s9, 1
      %s175 = smul.u32 16, %s18
      %s176 = smul.u32 2, %s19
      %p177 = scmp.lt.s32.totalorder %s175, 31
      %s178 = scalar_select %p177, %s175, 31
      %p179 = scmp.lt.s32.totalorder %s176, 1
      %s180 = scalar_select %p179, %s176, 1
      %s181 = smul.addr %s178, 2
      %s182 = sadd.s32 %s180, %s181
      %s183 = smul.addr %s182, 4
      %s184 = scalar_lea.vmem %s0, %s183
      %p185 = pneg %p49
      %p186 = pneg %p46
      %s187 = smul.u32 32, %s19
      %p188 = scmp.lt.s32.totalorder %s187, 31
      %s189 = scalar_select %p188, %s187, 31
      %s190 = smul.addr %s189, 4
      %s191 = scalar_lea.vmem %s1, %s190
      %p192 = pneg %p75
      %p193 = pneg %p72
      %p194 = pneg %p96
      %p195 = pneg %p93
      %p196 = pneg %p122
      %p197 = pneg %p119
      %s198 = smul.u32 16, %s18
      %p199 = scmp.lt.s32.totalorder %s198, 31
      %s200 = scalar_select %p199, %s198, 31
      %s201 = smul.addr %s200, 8
      %s202 = scalar_lea.vmem %s3, %s201
      %s203 = smul.u32 16, %s18
      %s204 = smul.u32 2, %s19
      %p205 = scmp.lt.s32.totalorder %s203, 31
      %s206 = scalar_select %p205, %s203, 31
      %p207 = scmp.lt.s32.totalorder %s204, 1
      %s208 = scalar_select %p207, %s204, 1
      %s209 = smul.addr %s206, 2
      %s210 = sadd.s32 %s208, %s209
      %s211 = smul.addr %s210, 4
      %s212 = scalar_lea.vmem %s0, %s211
      %s213 = smul.u32 16, %s18
      %s214 = smul.u32 2, %s19
      %s215 = smul.u32 32, %s19
      %p216 = scmp.lt.s32.totalorder %s215, 31
      %s217 = scalar_select %p216, %s215, 31
      %s218 = smul.addr %s217, 4
      %s219 = scalar_lea.vmem %s1, %s218
      %s220 = smul.u32 32, %s19
      %s221 = smul.u32 16, %s18
      %p222 = scmp.lt.s32.totalorder %s221, 31
      %s223 = scalar_select %p222, %s221, 31
      %s224 = smul.addr %s223, 8
      %s225 = scalar_lea.vmem %s3, %s224
      %s226 = smul.u32 16, %s18
      %p227 = scmp.eq.s32.totalorder %s19, 0
      // Predicated region
      $region33: #{gcn_forward.3} parent=31 // pred_check
        %p228 = pneg %p227
      $region34: #{gcn_forward.3} parent=31 // pred_check_branch
        %230 = sbr.rel (%p228) target = $region36
      $region35: #{gcn_forward.3} parent=31 // pred_region
        %231 = vst [vmem:[#allocation2] sm:$0xff] 0.0
        %232 = vst [vmem:[#allocation2 + $0x8] sm:$0xff] 0.0
        %233 = vst [vmem:[#allocation2 + $0x10] sm:$0xff] 0.0
        %234 = vst [vmem:[#allocation2 + $0x18] sm:$0xff] 0.0
        %235 = vst [vmem:[#allocation2 + $0x20] sm:$0xff] 0.0
        %236 = vst [vmem:[#allocation2 + $0x28] sm:$0xff] 0.0
        %237 = vst [vmem:[#allocation2 + $0x30] sm:$0xff] 0.0
        %238 = vst [vmem:[#allocation2 + $0x38] sm:$0xff] 0.0
        %239 = vst [vmem:[#allocation2 + $0x40] sm:$0xff] 0.0
        %240 = vst [vmem:[#allocation2 + $0x48] sm:$0xff] 0.0
        %241 = vst [vmem:[#allocation2 + $0x50] sm:$0xff] 0.0
        %242 = vst [vmem:[#allocation2 + $0x58] sm:$0xff] 0.0
        %243 = vst [vmem:[#allocation2 + $0x60] sm:$0xff] 0.0
        %244 = vst [vmem:[#allocation2 + $0x68] sm:$0xff] 0.0
        %245 = vst [vmem:[#allocation2 + $0x70] sm:$0xff] 0.0
        %246 = vst [vmem:[#allocation2 + $0x78] sm:$0xff] 0.0
      $region36: #{gcn_forward.3} parent=31 // pred_fallthru
        _
      %v247 = vld [vmem:[#allocation2] sm:$0xff]
      %v248 = vld [vmem:[#allocation2 + $0x8] sm:$0xff]
      %v249 = vld [vmem:[#allocation2 + $0x10] sm:$0xff]
      %v250 = vld [vmem:[#allocation2 + $0x18] sm:$0xff]
      %v251 = vld [vmem:[#allocation2 + $0x20] sm:$0xff]
      %v252 = vld [vmem:[#allocation2 + $0x28] sm:$0xff]
      %v253 = vld [vmem:[#allocation2 + $0x30] sm:$0xff]
      %v254 = vld [vmem:[#allocation2 + $0x38] sm:$0xff]
      %v255 = vld [vmem:[#allocation2 + $0x40] sm:$0xff]
      %v256 = vld [vmem:[#allocation2 + $0x48] sm:$0xff]
      %v257 = vld [vmem:[#allocation2 + $0x50] sm:$0xff]
      %v258 = vld [vmem:[#allocation2 + $0x58] sm:$0xff]
      %v259 = vld [vmem:[#allocation2 + $0x60] sm:$0xff]
      %v260 = vld [vmem:[#allocation2 + $0x68] sm:$0xff]
      %v261 = vld [vmem:[#allocation2 + $0x70] sm:$0xff]
      %v262 = vld [vmem:[#allocation2 + $0x78] sm:$0xff]
      %v263 = vld [vmem:[%s212] sm:$0xff]
      %v264 = vld [vmem:[%s212 + $0x8] sm:$0xff]
      %v265 = vld [vmem:[%s212 + $0x10] sm:$0xff]
      %v266 = vld [vmem:[%s212 + $0x18] sm:$0xff]
      %v267 = vld [vmem:[%s212 + $0x20] sm:$0xff]
      %v268 = vld [vmem:[%s212 + $0x28] sm:$0xff]
      %v269 = vld [vmem:[%s212 + $0x30] sm:$0xff]
      %v270 = vld [vmem:[%s212 + $0x38] sm:$0xff]
      %v271 = vld [vmem:[%s212 + $0x40] sm:$0xff]
      %v272 = vld [vmem:[%s212 + $0x48] sm:$0xff]
      %v273 = vld [vmem:[%s212 + $0x50] sm:$0xff]
      %v274 = vld [vmem:[%s212 + $0x58] sm:$0xff]
      %v275 = vld [vmem:[%s212 + $0x60] sm:$0xff]
      %v276 = vld [vmem:[%s212 + $0x68] sm:$0xff]
      %v277 = vld [vmem:[%s212 + $0x70] sm:$0xff]
      %v278 = vld [vmem:[%s212 + $0x78] sm:$0xff]
      %v279 = vld [vmem:[%s219] sm:$0xf]
      %v280 = vld [vmem:[%s219 + $0x4] sm:$0xf]
      %v281 = vld [vmem:[%s219 + $0x8] sm:$0xf]
      %v282 = vld [vmem:[%s219 + $0xc] sm:$0xf]
      %v283 = vld [vmem:[%s219 + $0x10] sm:$0xf]
      %v284 = vld [vmem:[%s219 + $0x14] sm:$0xf]
      %v285 = vld [vmem:[%s219 + $0x18] sm:$0xf]
      %v286 = vld [vmem:[%s219 + $0x1c] sm:$0xf]
      %v287 = vld [vmem:[%s219 + $0x20] sm:$0xf]
      %v288 = vld [vmem:[%s219 + $0x24] sm:$0xf]
      %v289 = vld [vmem:[%s219 + $0x28] sm:$0xf]
      %v290 = vld [vmem:[%s219 + $0x2c] sm:$0xf]
      %v291 = vld [vmem:[%s219 + $0x30] sm:$0xf]
      %v292 = vld [vmem:[%s219 + $0x34] sm:$0xf]
      %v293 = vld [vmem:[%s219 + $0x38] sm:$0xf]
      %v294 = vld [vmem:[%s219 + $0x3c] sm:$0xf]
      %v295 = vld [vmem:[%s219 + $0x40] sm:$0xf]
      %v296 = vld [vmem:[%s219 + $0x44] sm:$0xf]
      %v297 = vld [vmem:[%s219 + $0x48] sm:$0xf]
      %v298 = vld [vmem:[%s219 + $0x4c] sm:$0xf]
      %v299 = vld [vmem:[%s219 + $0x50] sm:$0xf]
      %v300 = vld [vmem:[%s219 + $0x54] sm:$0xf]
      %v301 = vld [vmem:[%s219 + $0x58] sm:$0xf]
      %v302 = vld [vmem:[%s219 + $0x5c] sm:$0xf]
      %v303 = vld [vmem:[%s219 + $0x60] sm:$0xf]
      %v304 = vld [vmem:[%s219 + $0x64] sm:$0xf]
      %v305 = vld [vmem:[%s219 + $0x68] sm:$0xf]
      %v306 = vld [vmem:[%s219 + $0x6c] sm:$0xf]
      %v307 = vld [vmem:[%s219 + $0x70] sm:$0xf]
      %v308 = vld [vmem:[%s219 + $0x74] sm:$0xf]
      %v309 = vld [vmem:[%s219 + $0x78] sm:$0xf]
      %v310 = vld [vmem:[%s219 + $0x7c] sm:$0xf]
      %v327 = vunpack.c.l.b16 %v263
      %v328 = vunpack.c.h.b16 %v263
      %v329 = vunpack.c.l.b16 %v264
      %v330 = vunpack.c.h.b16 %v264
      %v331 = vunpack.c.l.b16 %v265
      %v332 = vunpack.c.h.b16 %v265
      %v333 = vunpack.c.l.b16 %v266
      %v334 = vunpack.c.h.b16 %v266
      %v335 = vunpack.c.l.b16 %v267
      %v336 = vunpack.c.h.b16 %v267
      %v337 = vunpack.c.l.b16 %v268
      %v338 = vunpack.c.h.b16 %v268
      %v339 = vunpack.c.l.b16 %v269
      %v340 = vunpack.c.h.b16 %v269
      %v341 = vunpack.c.l.b16 %v270
      %v342 = vunpack.c.h.b16 %v270
      %v343 = vunpack.c.l.b16 %v271
      %v344 = vunpack.c.h.b16 %v271
      %v345 = vunpack.c.l.b16 %v272
      %v346 = vunpack.c.h.b16 %v272
      %v347 = vunpack.c.l.b16 %v273
      %v348 = vunpack.c.h.b16 %v273
      %v349 = vunpack.c.l.b16 %v274
      %v350 = vunpack.c.h.b16 %v274
      %v351 = vunpack.c.l.b16 %v275
      %v352 = vunpack.c.h.b16 %v275
      %v353 = vunpack.c.l.b16 %v276
      %v354 = vunpack.c.h.b16 %v276
      %v355 = vunpack.c.l.b16 %v277
      %v356 = vunpack.c.h.b16 %v277
      %v357 = vunpack.c.l.b16 %v278
      %v358 = vunpack.c.h.b16 %v278
      %v359 = vpack.c.b16 %v329, %v327
      %v360 = vpack.c.b16 %v330, %v328
      %v361 = vpack.c.b16 %v333, %v331
      %v362 = vpack.c.b16 %v334, %v332
      %v363 = vpack.c.b16 %v337, %v335
      %v364 = vpack.c.b16 %v338, %v336
      %v365 = vpack.c.b16 %v341, %v339
      %v366 = vpack.c.b16 %v342, %v340
      %v367 = vpack.c.b16 %v345, %v343
      %v368 = vpack.c.b16 %v346, %v344
      %v369 = vpack.c.b16 %v349, %v347
      %v370 = vpack.c.b16 %v350, %v348
      %v371 = vpack.c.b16 %v353, %v351
      %v372 = vpack.c.b16 %v354, %v352
      %v373 = vpack.c.b16 %v357, %v355
      %v374 = vpack.c.b16 %v358, %v356
      %v423 = vunpack.c.l.b16 %v279
      %v424 = vunpack.c.l.b16 %v280
      %v425 = vunpack.c.l.b16 %v281
      %v426 = vunpack.c.l.b16 %v282
      %v427 = vunpack.c.l.b16 %v283
      %v428 = vunpack.c.l.b16 %v284
      %v429 = vunpack.c.l.b16 %v285
      %v430 = vunpack.c.l.b16 %v286
      %v431 = vunpack.c.l.b16 %v287
      %v432 = vunpack.c.l.b16 %v288
      %v433 = vunpack.c.l.b16 %v289
      %v434 = vunpack.c.l.b16 %v290
      %v435 = vunpack.c.l.b16 %v291
      %v436 = vunpack.c.l.b16 %v292
      %v437 = vunpack.c.l.b16 %v293
      %v438 = vunpack.c.l.b16 %v294
      %v439 = vunpack.c.l.b16 %v295
      %v440 = vunpack.c.l.b16 %v296
      %v441 = vunpack.c.l.b16 %v297
      %v442 = vunpack.c.l.b16 %v298
      %v443 = vunpack.c.l.b16 %v299
      %v444 = vunpack.c.l.b16 %v300
      %v445 = vunpack.c.l.b16 %v301
      %v446 = vunpack.c.l.b16 %v302
      %v447 = vunpack.c.l.b16 %v303
      %v448 = vunpack.c.l.b16 %v304
      %v449 = vunpack.c.l.b16 %v305
      %v450 = vunpack.c.l.b16 %v306
      %v451 = vunpack.c.l.b16 %v307
      %v452 = vunpack.c.l.b16 %v308
      %v453 = vunpack.c.l.b16 %v309
      %v454 = vunpack.c.l.b16 %v310
      %v455 = vpack.c.b16 %v424, %v423
      %v456 = vpack.c.b16 %v426, %v425
      %v457 = vpack.c.b16 %v428, %v427
      %v458 = vpack.c.b16 %v430, %v429
      %v459 = vpack.c.b16 %v432, %v431
      %v460 = vpack.c.b16 %v434, %v433
      %v461 = vpack.c.b16 %v436, %v435
      %v462 = vpack.c.b16 %v438, %v437
      %v463 = vpack.c.b16 %v440, %v439
      %v464 = vpack.c.b16 %v442, %v441
      %v465 = vpack.c.b16 %v444, %v443
      %v466 = vpack.c.b16 %v446, %v445
      %v467 = vpack.c.b16 %v448, %v447
      %v468 = vpack.c.b16 %v450, %v449
      %v469 = vpack.c.b16 %v452, %v451
      %v470 = vpack.c.b16 %v454, %v453
      %487 = vmatpush.bf16.msra.mxu0 %v462
      %488 = vmatpush.bf16.msra.mxu0 %v461
      %489 = vmatpush.bf16.msra.mxu0 %v460
      %490 = vmatpush.bf16.msra.mxu0 %v459
      %491 = vmatpush.bf16.msra.mxu0 %v458
      %492 = vmatpush.bf16.msra.mxu0 %v457
      %493 = vmatpush.bf16.msra.mxu0 %v456
      %494 = vmatpush.bf16.msra.mxu0 %v455
      %495 = vmatmul.bf16.gmra.mxu0 %v359
      %v496 = vpop.f32.mrf.mxu0
      %v497 = vadd.f32 0.0, %v496
      %v498 = vpop.f32.mrf.mxu0
      %v499 = vadd.f32 0.0, %v498
      %500 = vmatmul.bf16.gmra.mxu0 %v361
      %v501 = vpop.f32.mrf.mxu0
      %v502 = vadd.f32 0.0, %v501
      %v503 = vpop.f32.mrf.mxu0
      %v504 = vadd.f32 0.0, %v503
      %505 = vmatmul.bf16.gmra.mxu0 %v363
      %v506 = vpop.f32.mrf.mxu0
      %v507 = vadd.f32 0.0, %v506
      %v508 = vpop.f32.mrf.mxu0
      %v509 = vadd.f32 0.0, %v508
      %510 = vmatmul.bf16.gmra.mxu0 %v365
      %v511 = vpop.f32.mrf.mxu0
      %v512 = vadd.f32 0.0, %v511
      %v513 = vpop.f32.mrf.mxu0
      %v514 = vadd.f32 0.0, %v513
      %515 = vmatmul.bf16.gmra.mxu0 %v367
      %v516 = vpop.f32.mrf.mxu0
      %v517 = vadd.f32 0.0, %v516
      %v518 = vpop.f32.mrf.mxu0
      %v519 = vadd.f32 0.0, %v518
      %520 = vmatmul.bf16.gmra.mxu0 %v369
      %v521 = vpop.f32.mrf.mxu0
      %v522 = vadd.f32 0.0, %v521
      %v523 = vpop.f32.mrf.mxu0
      %v524 = vadd.f32 0.0, %v523
      %525 = vmatmul.bf16.gmra.mxu0 %v371
      %v526 = vpop.f32.mrf.mxu0
      %v527 = vadd.f32 0.0, %v526
      %v528 = vpop.f32.mrf.mxu0
      %v529 = vadd.f32 0.0, %v528
      %530 = vmatmul.bf16.gmra.mxu0 %v373
      %v531 = vpop.f32.mrf.mxu0
      %v532 = vadd.f32 0.0, %v531
      %v533 = vpop.f32.mrf.mxu0
      %v534 = vadd.f32 0.0, %v533
      %535 = vdwg.mxu0
      %536 = vmatpush.bf16.msra.mxu0 %v470
      %537 = vmatpush.bf16.msra.mxu0 %v469
      %538 = vmatpush.bf16.msra.mxu0 %v468
      %539 = vmatpush.bf16.msra.mxu0 %v467
      %540 = vmatpush.bf16.msra.mxu0 %v466
      %541 = vmatpush.bf16.msra.mxu0 %v465
      %542 = vmatpush.bf16.msra.mxu0 %v464
      %543 = vmatpush.bf16.msra.mxu0 %v463
      %544 = vmatmul.bf16.gmra.mxu0 %v360
      %v545 = vpop.f32.mrf.mxu0
      %v546 = vadd.f32 %v497, %v545
      %v547 = vpop.f32.mrf.mxu0
      %v548 = vadd.f32 %v499, %v547
      %549 = vmatmul.bf16.gmra.mxu0 %v362
      %v550 = vpop.f32.mrf.mxu0
      %v551 = vadd.f32 %v502, %v550
      %v552 = vpop.f32.mrf.mxu0
      %v553 = vadd.f32 %v504, %v552
      %554 = vmatmul.bf16.gmra.mxu0 %v364
      %v555 = vpop.f32.mrf.mxu0
      %v556 = vadd.f32 %v507, %v555
      %v557 = vpop.f32.mrf.mxu0
      %v558 = vadd.f32 %v509, %v557
      %559 = vmatmul.bf16.gmra.mxu0 %v366
      %v560 = vpop.f32.mrf.mxu0
      %v561 = vadd.f32 %v512, %v560
      %v562 = vpop.f32.mrf.mxu0
      %v563 = vadd.f32 %v514, %v562
      %564 = vmatmul.bf16.gmra.mxu0 %v368
      %v565 = vpop.f32.mrf.mxu0
      %v566 = vadd.f32 %v517, %v565
      %v567 = vpop.f32.mrf.mxu0
      %v568 = vadd.f32 %v519, %v567
      %569 = vmatmul.bf16.gmra.mxu0 %v370
      %v570 = vpop.f32.mrf.mxu0
      %v571 = vadd.f32 %v522, %v570
      %v572 = vpop.f32.mrf.mxu0
      %v573 = vadd.f32 %v524, %v572
      %574 = vmatmul.bf16.gmra.mxu0 %v372
      %v575 = vpop.f32.mrf.mxu0
      %v576 = vadd.f32 %v527, %v575
      %v577 = vpop.f32.mrf.mxu0
      %v578 = vadd.f32 %v529, %v577
      %579 = vmatmul.bf16.gmra.mxu0 %v374
      %v580 = vpop.f32.mrf.mxu0
      %v581 = vadd.f32 %v532, %v580
      %v582 = vpop.f32.mrf.mxu0
      %v583 = vadd.f32 %v534, %v582
      %584 = vdwg.mxu0
      %v585 = vadd.f32 %v247, %v546
      %v586 = vadd.f32 %v248, %v548
      %v587 = vadd.f32 %v249, %v551
      %v588 = vadd.f32 %v250, %v553
      %v589 = vadd.f32 %v251, %v556
      %v590 = vadd.f32 %v252, %v558
      %v591 = vadd.f32 %v253, %v561
      %v592 = vadd.f32 %v254, %v563
      %v593 = vadd.f32 %v255, %v566
      %v594 = vadd.f32 %v256, %v568
      %v595 = vadd.f32 %v257, %v571
      %v596 = vadd.f32 %v258, %v573
      %v597 = vadd.f32 %v259, %v576
      %v598 = vadd.f32 %v260, %v578
      %v599 = vadd.f32 %v261, %v581
      %v600 = vadd.f32 %v262, %v583
      %601 = vst [vmem:[#allocation2] sm:$0xff] %v585
      %602 = vst [vmem:[#allocation2 + $0x8] sm:$0xff] %v586
      %603 = vst [vmem:[#allocation2 + $0x10] sm:$0xff] %v587
      %604 = vst [vmem:[#allocation2 + $0x18] sm:$0xff] %v588
      %605 = vst [vmem:[#allocation2 + $0x20] sm:$0xff] %v589
      %606 = vst [vmem:[#allocation2 + $0x28] sm:$0xff] %v590
      %607 = vst [vmem:[#allocation2 + $0x30] sm:$0xff] %v591
      %608 = vst [vmem:[#allocation2 + $0x38] sm:$0xff] %v592
      %609 = vst [vmem:[#allocation2 + $0x40] sm:$0xff] %v593
      %610 = vst [vmem:[#allocation2 + $0x48] sm:$0xff] %v594
      %611 = vst [vmem:[#allocation2 + $0x50] sm:$0xff] %v595
      %612 = vst [vmem:[#allocation2 + $0x58] sm:$0xff] %v596
      %613 = vst [vmem:[#allocation2 + $0x60] sm:$0xff] %v597
      %614 = vst [vmem:[#allocation2 + $0x68] sm:$0xff] %v598
      %615 = vst [vmem:[#allocation2 + $0x70] sm:$0xff] %v599
      %616 = vst [vmem:[#allocation2 + $0x78] sm:$0xff] %v600
      // Predicated region
      $region37: #{gcn_forward.3} parent=31 // pred_check
        %p617 = pneg %p227
      $region38: #{gcn_forward.3} parent=31 // pred_check_branch
        %619 = sbr.rel (%p617) target = $region40
      $region39: #{gcn_forward.3} parent=31 // pred_region
        %v620 = vld [vmem:[#allocation2] sm:$0xff]
        %v621 = vld [vmem:[#allocation2 + $0x8] sm:$0xff]
        %v622 = vld [vmem:[#allocation2 + $0x10] sm:$0xff]
        %v623 = vld [vmem:[#allocation2 + $0x18] sm:$0xff]
        %v624 = vld [vmem:[#allocation2 + $0x20] sm:$0xff]
        %v625 = vld [vmem:[#allocation2 + $0x28] sm:$0xff]
        %v626 = vld [vmem:[#allocation2 + $0x30] sm:$0xff]
        %v627 = vld [vmem:[#allocation2 + $0x38] sm:$0xff]
        %v628 = vld [vmem:[#allocation2 + $0x40] sm:$0xff]
        %v629 = vld [vmem:[#allocation2 + $0x48] sm:$0xff]
        %v630 = vld [vmem:[#allocation2 + $0x50] sm:$0xff]
        %v631 = vld [vmem:[#allocation2 + $0x58] sm:$0xff]
        %v632 = vld [vmem:[#allocation2 + $0x60] sm:$0xff]
        %v633 = vld [vmem:[#allocation2 + $0x68] sm:$0xff]
        %v634 = vld [vmem:[#allocation2 + $0x70] sm:$0xff]
        %v635 = vld [vmem:[#allocation2 + $0x78] sm:$0xff]
        %v636 = vld [vmem:[%s2] sm:$0x1]
        %v638 = vperm.slane %v636, 0
        %v640 = vadd.f32 %v620, %v638
        %v641 = vadd.f32 %v621, %v638
        %v642 = vadd.f32 %v622, %v638
        %v643 = vadd.f32 %v623, %v638
        %v644 = vadd.f32 %v624, %v638
        %v645 = vadd.f32 %v625, %v638
        %v646 = vadd.f32 %v626, %v638
        %v647 = vadd.f32 %v627, %v638
        %v648 = vadd.f32 %v628, %v638
        %v649 = vadd.f32 %v629, %v638
        %v650 = vadd.f32 %v630, %v638
        %v651 = vadd.f32 %v631, %v638
        %v652 = vadd.f32 %v632, %v638
        %v653 = vadd.f32 %v633, %v638
        %v654 = vadd.f32 %v634, %v638
        %v655 = vadd.f32 %v635, %v638
        %v656 = vlaneseq
        %v657 = vand.u32 %v656, 127
        %vm658 = vcmp.lt.s32.totalorder %v657, 7
        %v659 = vsel %vm658, %v640, -1e+30
        %v660 = vsel %vm658, %v641, -1e+30
        %v661 = vsel %vm658, %v642, -1e+30
        %v662 = vsel %vm658, %v643, -1e+30
        %v663 = vsel %vm658, %v644, -1e+30
        %v664 = vsel %vm658, %v645, -1e+30
        %v665 = vsel %vm658, %v646, -1e+30
        %v666 = vsel %vm658, %v647, -1e+30
        %v667 = vsel %vm658, %v648, -1e+30
        %v668 = vsel %vm658, %v649, -1e+30
        %v669 = vsel %vm658, %v650, -1e+30
        %v670 = vsel %vm658, %v651, -1e+30
        %v671 = vsel %vm658, %v652, -1e+30
        %v672 = vsel %vm658, %v653, -1e+30
        %v673 = vsel %vm658, %v654, -1e+30
        %v674 = vsel %vm658, %v655, -1e+30
        %675 = vmax.xlane.f32.xlu0 %v659
        %v676 = vpop.xlane.xlu0 %675
        %677 = vmax.xlane.f32.xlu0 %v660
        %v678 = vpop.xlane.xlu0 %677
        %679 = vmax.xlane.f32.xlu0 %v661
        %v680 = vpop.xlane.xlu0 %679
        %681 = vmax.xlane.f32.xlu0 %v662
        %v682 = vpop.xlane.xlu0 %681
        %683 = vmax.xlane.f32.xlu0 %v663
        %v684 = vpop.xlane.xlu0 %683
        %685 = vmax.xlane.f32.xlu0 %v664
        %v686 = vpop.xlane.xlu0 %685
        %687 = vmax.xlane.f32.xlu0 %v665
        %v688 = vpop.xlane.xlu0 %687
        %689 = vmax.xlane.f32.xlu0 %v666
        %v690 = vpop.xlane.xlu0 %689
        %691 = vmax.xlane.f32.xlu0 %v667
        %v692 = vpop.xlane.xlu0 %691
        %693 = vmax.xlane.f32.xlu0 %v668
        %v694 = vpop.xlane.xlu0 %693
        %695 = vmax.xlane.f32.xlu0 %v669
        %v696 = vpop.xlane.xlu0 %695
        %697 = vmax.xlane.f32.xlu0 %v670
        %v698 = vpop.xlane.xlu0 %697
        %699 = vmax.xlane.f32.xlu0 %v671
        %v700 = vpop.xlane.xlu0 %699
        %701 = vmax.xlane.f32.xlu0 %v672
        %v702 = vpop.xlane.xlu0 %701
        %703 = vmax.xlane.f32.xlu0 %v673
        %v704 = vpop.xlane.xlu0 %703
        %705 = vmax.xlane.f32.xlu0 %v674
        %v706 = vpop.xlane.xlu0 %705
        %v707 = vsub.f32 %v659, %v676
        %v708 = vsub.f32 %v660, %v678
        %v709 = vsub.f32 %v661, %v680
        %v710 = vsub.f32 %v662, %v682
        %v711 = vsub.f32 %v663, %v684
        %v712 = vsub.f32 %v664, %v686
        %v713 = vsub.f32 %v665, %v688
        %v714 = vsub.f32 %v666, %v690
        %v715 = vsub.f32 %v667, %v692
        %v716 = vsub.f32 %v668, %v694
        %v717 = vsub.f32 %v669, %v696
        %v718 = vsub.f32 %v670, %v698
        %v719 = vsub.f32 %v671, %v700
        %v720 = vsub.f32 %v672, %v702
        %v721 = vsub.f32 %v673, %v704
        %v722 = vsub.f32 %v674, %v706
        %v723 = vmul.f32 %v707, 1.442695
        %v724 = vpow.pop %v723
        %v725 = vmul.f32 %v708, 1.442695
        %v726 = vpow.pop %v725
        %v727 = vmul.f32 %v709, 1.442695
        %v728 = vpow.pop %v727
        %v729 = vmul.f32 %v710, 1.442695
        %v730 = vpow.pop %v729
        %v731 = vmul.f32 %v711, 1.442695
        %v732 = vpow.pop %v731
        %v733 = vmul.f32 %v712, 1.442695
        %v734 = vpow.pop %v733
        %v735 = vmul.f32 %v713, 1.442695
        %v736 = vpow.pop %v735
        %v737 = vmul.f32 %v714, 1.442695
        %v738 = vpow.pop %v737
        %v739 = vmul.f32 %v715, 1.442695
        %v740 = vpow.pop %v739
        %v741 = vmul.f32 %v716, 1.442695
        %v742 = vpow.pop %v741
        %v743 = vmul.f32 %v717, 1.442695
        %v744 = vpow.pop %v743
        %v745 = vmul.f32 %v718, 1.442695
        %v746 = vpow.pop %v745
        %v747 = vmul.f32 %v719, 1.442695
        %v748 = vpow.pop %v747
        %v749 = vmul.f32 %v720, 1.442695
        %v750 = vpow.pop %v749
        %v751 = vmul.f32 %v721, 1.442695
        %v752 = vpow.pop %v751
        %v753 = vmul.f32 %v722, 1.442695
        %v754 = vpow.pop %v753
        %755 = vadd.xlane.f32.xlu0 %v724
        %v756 = vpop.xlane.xlu0 %755
        %757 = vadd.xlane.f32.xlu0 %v726
        %v758 = vpop.xlane.xlu0 %757
        %759 = vadd.xlane.f32.xlu0 %v728
        %v760 = vpop.xlane.xlu0 %759
        %761 = vadd.xlane.f32.xlu0 %v730
        %v762 = vpop.xlane.xlu0 %761
        %763 = vadd.xlane.f32.xlu0 %v732
        %v764 = vpop.xlane.xlu0 %763
        %765 = vadd.xlane.f32.xlu0 %v734
        %v766 = vpop.xlane.xlu0 %765
        %767 = vadd.xlane.f32.xlu0 %v736
        %v768 = vpop.xlane.xlu0 %767
        %769 = vadd.xlane.f32.xlu0 %v738
        %v770 = vpop.xlane.xlu0 %769
        %771 = vadd.xlane.f32.xlu0 %v740
        %v772 = vpop.xlane.xlu0 %771
        %773 = vadd.xlane.f32.xlu0 %v742
        %v774 = vpop.xlane.xlu0 %773
        %775 = vadd.xlane.f32.xlu0 %v744
        %v776 = vpop.xlane.xlu0 %775
        %777 = vadd.xlane.f32.xlu0 %v746
        %v778 = vpop.xlane.xlu0 %777
        %779 = vadd.xlane.f32.xlu0 %v748
        %v780 = vpop.xlane.xlu0 %779
        %781 = vadd.xlane.f32.xlu0 %v750
        %v782 = vpop.xlane.xlu0 %781
        %783 = vadd.xlane.f32.xlu0 %v752
        %v784 = vpop.xlane.xlu0 %783
        %785 = vadd.xlane.f32.xlu0 %v754
        %v786 = vpop.xlane.xlu0 %785
        %v787 = vlog2.pop %v756
        %v788 = vmul.f32 %v787, 0.6931472
        %v789 = vlog2.pop %v758
        %v790 = vmul.f32 %v789, 0.6931472
        %v791 = vlog2.pop %v760
        %v792 = vmul.f32 %v791, 0.6931472
        %v793 = vlog2.pop %v762
        %v794 = vmul.f32 %v793, 0.6931472
        %v795 = vlog2.pop %v764
        %v796 = vmul.f32 %v795, 0.6931472
        %v797 = vlog2.pop %v766
        %v798 = vmul.f32 %v797, 0.6931472
        %v799 = vlog2.pop %v768
        %v800 = vmul.f32 %v799, 0.6931472
        %v801 = vlog2.pop %v770
        %v802 = vmul.f32 %v801, 0.6931472
        %v803 = vlog2.pop %v772
        %v804 = vmul.f32 %v803, 0.6931472
        %v805 = vlog2.pop %v774
        %v806 = vmul.f32 %v805, 0.6931472
        %v807 = vlog2.pop %v776
        %v808 = vmul.f32 %v807, 0.6931472
        %v809 = vlog2.pop %v778
        %v810 = vmul.f32 %v809, 0.6931472
        %v811 = vlog2.pop %v780
        %v812 = vmul.f32 %v811, 0.6931472
        %v813 = vlog2.pop %v782
        %v814 = vmul.f32 %v813, 0.6931472
        %v815 = vlog2.pop %v784
        %v816 = vmul.f32 %v815, 0.6931472
        %v817 = vlog2.pop %v786
        %v818 = vmul.f32 %v817, 0.6931472
        %v819 = vadd.f32 %v788, %v676
        %v820 = vadd.f32 %v790, %v678
        %v821 = vadd.f32 %v792, %v680
        %v822 = vadd.f32 %v794, %v682
        %v823 = vadd.f32 %v796, %v684
        %v824 = vadd.f32 %v798, %v686
        %v825 = vadd.f32 %v800, %v688
        %v826 = vadd.f32 %v802, %v690
        %v827 = vadd.f32 %v804, %v692
        %v828 = vadd.f32 %v806, %v694
        %v829 = vadd.f32 %v808, %v696
        %v830 = vadd.f32 %v810, %v698
        %v831 = vadd.f32 %v812, %v700
        %v832 = vadd.f32 %v814, %v702
        %v833 = vadd.f32 %v816, %v704
        %v834 = vadd.f32 %v818, %v706
        %v835 = vsub.f32 %v659, %v819
        %v836 = vsub.f32 %v660, %v820
        %v837 = vsub.f32 %v661, %v821
        %v838 = vsub.f32 %v662, %v822
        %v839 = vsub.f32 %v663, %v823
        %v840 = vsub.f32 %v664, %v824
        %v841 = vsub.f32 %v665, %v825
        %v842 = vsub.f32 %v666, %v826
        %v843 = vsub.f32 %v667, %v827
        %v844 = vsub.f32 %v668, %v828
        %v845 = vsub.f32 %v669, %v829
        %v846 = vsub.f32 %v670, %v830
        %v847 = vsub.f32 %v671, %v831
        %v848 = vsub.f32 %v672, %v832
        %v849 = vsub.f32 %v673, %v833
        %v850 = vsub.f32 %v674, %v834
        %851 = vst [vmem:[%s225] sm:$0xff] %v835
        %852 = vst [vmem:[%s225 + $0x8] sm:$0xff] %v836
        %853 = vst [vmem:[%s225 + $0x10] sm:$0xff] %v837
        %854 = vst [vmem:[%s225 + $0x18] sm:$0xff] %v838
        %855 = vst [vmem:[%s225 + $0x20] sm:$0xff] %v839
        %856 = vst [vmem:[%s225 + $0x28] sm:$0xff] %v840
        %857 = vst [vmem:[%s225 + $0x30] sm:$0xff] %v841
        %858 = vst [vmem:[%s225 + $0x38] sm:$0xff] %v842
        %859 = vst [vmem:[%s225 + $0x40] sm:$0xff] %v843
        %860 = vst [vmem:[%s225 + $0x48] sm:$0xff] %v844
        %861 = vst [vmem:[%s225 + $0x50] sm:$0xff] %v845
        %862 = vst [vmem:[%s225 + $0x58] sm:$0xff] %v846
        %863 = vst [vmem:[%s225 + $0x60] sm:$0xff] %v847
        %864 = vst [vmem:[%s225 + $0x68] sm:$0xff] %v848
        %865 = vst [vmem:[%s225 + $0x70] sm:$0xff] %v849
        %866 = vst [vmem:[%s225 + $0x78] sm:$0xff] %v850
      $region40: #{gcn_forward.3} parent=31 // pred_fallthru
        _
      %s867 = smul.u32 16, %s18
      %p868 = scmp.lt.s32.totalorder %s867, 31
      %s869 = scalar_select %p868, %s867, 31
      %s870 = smul.addr %s869, 8
      %s871 = scalar_lea.vmem %s3, %s870
      // Predicated region
      $region41: #{gcn_forward.3} parent=31 // pred_check
        %p872 = pneg %p119
      $region42: #{gcn_forward.3} parent=31 // pred_check_branch
        %874 = sbr.rel (%p872) target = $region44
      $region43: #{gcn_forward.3} parent=31 // pred_region
        %s875 = smul.u32 16, %s18
      $region44: #{gcn_forward.3} parent=31 // pred_fallthru
        _
    $region32: #{gcn_forward.3} parent=5 // pred_fallthru
      _
    %p876 = scmp.le.s32.totalorder 2, %s9
    // Predicated region
    $region45: #{gcn_forward.3} parent=5 // pred_check
      %p877 = pneg %p876
    $region46: #{gcn_forward.3} parent=5 // pred_check_branch
      %879 = sbr.rel (%p877) target = $region48
    $region47: #{gcn_forward.3} parent=5 // pred_region
      %s880 = ssub.s32 %s9, 2
      // Predicated region
      $region49: #{gcn_forward.3} parent=47 // pred_check
        %p881 = pneg %p125
      $region50: #{gcn_forward.3} parent=47 // pred_check_branch
        %883 = sbr.rel (%p881) target = $region52
      $region51: #{gcn_forward.3} parent=47 // pred_region
        %s884 = smul.u32 16, %s20
        %p885 = scmp.lt.s32.totalorder %s884, 31
        %s886 = scalar_select %p885, %s884, 31
        %s887 = smul.addr %s886, 8
        %s888 = scalar_lea.vmem %s3, %s887
      $region52: #{gcn_forward.3} parent=47 // pred_fallthru
        _
    $region48: #{gcn_forward.3} parent=5 // pred_fallthru
      _
  $region6: #{gcn_forward.3} parent=0 // loop_footer
    %s13 = sadd.s32 1, %s9
  $region7: #{gcn_forward.3} parent=0 // loop_footer_branch
    %8 = sbr.rel target = $region3
  $region8: #{gcn_forward.3} parent=0 // loop_exit
    _

</llo_original>
